<compile_context>
chip_gen: v7x
topology: tpu7x:2x2x1
jax: 0.10.0
libtpu: 0.0.40
codegen_flags: <defaults>
</compile_context>

<pallas_src>
import functools

import jax
import jax.numpy as jnp
from jax.experimental import pallas as pl
from jax.experimental.pallas import tpu as pltpu

SQRT1_2 = 0.7071067811865476


def _erf(z):
    # Abramowitz & Stegun 7.1.26, |err| <= 1.5e-7 (float32-level accuracy).
    a1, a2, a3, a4, a5 = (0.254829592, -0.284496736, 1.421413741,
                          -1.453152027, 1.061405429)
    p = 0.3275911
    s = jnp.where(z >= 0.0, 1.0, -1.0)
    az = jnp.abs(z)
    t = 1.0 / (1.0 + p * az)
    poly = ((((a5 * t + a4) * t + a3) * t + a2) * t + a1) * t
    return s * (1.0 - poly * jnp.exp(-az * az))


def _gelu_exact(x):
    # nn.GELU() default (erf form)
    return 0.5 * x * (1.0 + _erf(x * SQRT1_2))


def _fused_kernel(x_ref, win_ref, bin_ref, w1_ref, b1_ref, w2_ref, b2_ref,
                  krs_ref, dww_ref, dwb_ref, alpha_ref, beta_ref,
                  wout_ref, bout_ref, y_ref, *, hw, inv_hw, spectral_dtype):
    """One grid step = one image: x block (1, C, HW), spatial on the lane dim."""
    dot = functools.partial(jnp.dot, preferred_element_type=jnp.float32)
    sd = spectral_dtype

    x = x_ref[0]                                     # (C, HW) f32

    # ---- in_conv (1x1) + GELU -----------------------------------------------
    t = _gelu_exact(dot(win_ref[...], x) + bin_ref[...])
    xs = jnp.abs(t)                                  # x_sca

    # ---- FFM.dwconv1 / dwconv2 (1x1) ----------------------------------------
    x1 = dot(w1_ref[...], xs) + b1_ref[...]
    x2 = dot(w2_ref[...], xs) + b2_ref[...]

    # ---- FFM spectral stage: |ifft2(x1 * fft2(x2))| --------------------------
    # fft2 of a row-major-flattened plane is a right matmul by K = F_H (x) F_W.
    # krs = [Re(K) | Im(K)]  (HW, 2HW): each stage is one lane-dense MXU matmul.
    krs = krs_ref[...]
    fw = dot(x2.astype(sd), krs)                     # (C, 2HW) = [x2@Kr | x2@Ki]
    yr = x1 * fw[:, :hw]                             # Re(x1 * fft2(x2))
    yi = x1 * fw[:, hw:]                             # Im(x1 * fft2(x2))
    zr = dot(yr.astype(sd), krs)                     # [yr@Kr | yr@Ki]
    zi = dot(yi.astype(sd), krs)                     # [yi@Kr | yi@Ki]
    # ifft2(Y) = Y @ conj(K) / (H*W)   (norm='backward')
    zre = (zr[:, :hw] + zi[:, hw:]) * inv_hw
    zim = (zi[:, :hw] - zr[:, hw:]) * inv_hw
    mag = jnp.sqrt(zre * zre + zim * zim)

    # ---- FFM epilogue + dw_11 + residual + ReLU + out_conv -------------------
    fgm = mag * alpha_ref[...] + xs * beta_ref[...]
    s = x + (t * dww_ref[...] + dwb_ref[...]) + fgm
    s = jnp.maximum(s, 0.0)
    y_ref[0] = (dot(wout_ref[...], s) + bout_ref[...]).astype(y_ref.dtype)


def _dft_mats(n):
    # real / imag parts of exp(-2*pi*i*k*m/n); symmetric matrices.
    k = jnp.arange(n, dtype=jnp.float32)
    ang = 2.0 * jnp.pi * jnp.outer(k, k) / n
    return jnp.cos(ang), -jnp.sin(ang)


def improved_fft_kernel_forward(x, params, spectral_dtype=jnp.bfloat16):
    """ImprovedFFTKernel.forward.  x: (N, C, H, W) float32 -> (N, C, H, W)."""
    N, C, H, W = x.shape
    HW = H * W
    f32 = jnp.float32

    # 1x1-conv weights used directly as (C_out, C_in) left operands: out = W @ X.
    w_in = params["w_in"].astype(f32)
    w1 = params["w1"].astype(f32)
    w2 = params["w2"].astype(f32)
    w_out = params["w_out"].astype(f32)

    def col(v):                                      # per-channel params -> (C, 1)
        return v.reshape(C, 1).astype(f32)

    b_in, b1, b2 = col(params["b_in"]), col(params["b1"]), col(params["b2"])
    b_out = col(params["b_out"])
    dw_w, dw_b = col(params["dw_w"]), col(params["dw_b"])
    alpha, beta = col(params["alpha"]), col(params["beta"])

    # Kronecker DFT operator (fft2(plane) row-major-flattened == flat @ K).
    ah, bh = _dft_mats(H)
    aw, bw = _dft_mats(W)
    kr = jnp.kron(ah, aw) - jnp.kron(bh, bw)         # Re(F_H (x) F_W)
    ki = jnp.kron(ah, bw) + jnp.kron(bh, aw)         # Im(F_H (x) F_W)
    krs = jnp.concatenate([kr, ki], axis=1).astype(spectral_dtype)   # (HW, 2HW)

    # NCHW kept end-to-end: only free reshapes, no transposes, no HBM round trips.
    x3 = x.reshape(N, C, HW).astype(f32)

    # VMEM budget: double-buffered image blocks + resident constants + temporaries.
    blk = C * HW * 4
    est = (2 * 2 * blk
           + 2 * HW * 2 * HW * jnp.dtype(spectral_dtype).itemsize
           + 2 * (4 * C * C + 8 * C) * 4
           + 24 * blk)
    if 4 * est > (64 << 20):
        # TODO(synk): switch the spectral stage to separable per-axis DFT matmuls for
        # large feature maps (the Kronecker operator scales as (H*W)^2).
        raise NotImplementedError("H*W too large for the fused Kronecker-DFT path")
    vmem_limit = int(min(max(4 * est, 16 << 20), 64 << 20))

    img = pl.BlockSpec((1, C, HW), lambda n: (n, 0, 0))
    cmat = pl.BlockSpec((C, C), lambda n: (0, 0))
    cvec = pl.BlockSpec((C, 1), lambda n: (0, 0))
    kmat = pl.BlockSpec((HW, 2 * HW), lambda n: (0, 0))

    kern = functools.partial(_fused_kernel, hw=HW, inv_hw=1.0 / float(HW),
                             spectral_dtype=spectral_dtype)

    y3 = pl.pallas_call(
        kern,
        out_shape=jax.ShapeDtypeStruct((N, C, HW), f32),
        grid=(N,),
        in_specs=[img, cmat, cvec, cmat, cvec, cmat, cvec, kmat,
                  cvec, cvec, cvec, cvec, cmat, cvec],
        out_specs=img,
        compiler_params=pltpu.CompilerParams(
            dimension_semantics=("parallel",),
            vmem_limit_bytes=vmem_limit),
    )(x3, w_in, b_in, w1, b1, w2, b2, krs, dw_w, dw_b, alpha, beta, w_out, b_out)

    return y3.reshape(N, C, H, W)


# ---------------- pure-JAX reference (for numerical verification) ----------------------
def reference_forward(x, params):
    def conv1x1(v, w, b):
        return (jnp.einsum("oc,nchw->nohw", w, v, precision="highest")
                + b[None, :, None, None])

    t = conv1x1(x, params["w_in"], params["b_in"])
    t = 0.5 * t * (1.0 + jax.scipy.special.erf(t * SQRT1_2))
    xs = jnp.abs(t)
    x1 = conv1x1(xs, params["w1"], params["b1"])
    x2 = conv1x1(xs, params["w2"], params["b2"])
    x2f = jnp.fft.fft2(x2)
    o = jnp.fft.ifft2(x1 * x2f)
    mag = jnp.abs(o).astype(jnp.float32)
    fgm = (mag * params["alpha"][None, :, None, None]
           + xs * params["beta"][None, :, None, None])
    dw = (t * params["dw_w"][None, :, None, None]
          + params["dw_b"][None, :, None, None])
    s = jnp.maximum(x + dw + fgm, 0.0)
    return conv1x1(s, params["w_out"], params["b_out"])


if __name__ == "__main__":
    N, C, H, W = 2, 4, 16, 16
    f32 = jnp.float32
    key = jax.random.PRNGKey(0)
    ks = jax.random.split(key, 13)
    params = {
        "w_in": jax.random.normal(ks[0], (C, C), f32) / jnp.sqrt(C).astype(f32),
        "b_in": jax.random.normal(ks[1], (C,), f32) * 0.1,
        "w1": jax.random.normal(ks[2], (C, C), f32) / jnp.sqrt(C).astype(f32),
        "b1": jax.random.normal(ks[3], (C,), f32) * 0.1,
        "w2": jax.random.normal(ks[4], (C, C), f32) / jnp.sqrt(C).astype(f32),
        "b2": jax.random.normal(ks[5], (C,), f32) * 0.1,
        "dw_w": jax.random.normal(ks[6], (C,), f32),
        "dw_b": jax.random.normal(ks[7], (C,), f32) * 0.1,
        # PyTorch __init__ sets alpha=zeros, beta=ones; nonzero values are used here
        # so the spectral path is actually exercised numerically.
        "alpha": jax.random.normal(ks[8], (C,), f32) * 0.5,
        "beta": 1.0 + jax.random.normal(ks[9], (C,), f32) * 0.1,
        "w_out": jax.random.normal(ks[10], (C, C), f32) / jnp.sqrt(C).astype(f32),
        "b_out": jax.random.normal(ks[11], (C,), f32) * 0.1,
    }
    x = jax.random.normal(ks[12], (N, C, H, W), f32)

    y_ref = reference_forward(x, params)

    # Exact-path check: f32 spectral operator.
    y32 = jax.block_until_ready(
        improved_fft_kernel_forward(x, params, spectral_dtype=jnp.float32))
    assert y32.shape == (N, C, H, W)
    if not jnp.allclose(y32, y_ref, atol=5e-3, rtol=5e-3):
        raise AssertionError(
            f"f32 path mismatch vs reference, max abs err="
            f"{float(jnp.max(jnp.abs(y32 - y_ref)))}")

    # Fast path (default): bf16 spectral matmuls with f32 accumulation.
    ybf = jax.block_until_ready(improved_fft_kernel_forward(x, params))
    err = float(jnp.max(jnp.abs(ybf - y_ref)))
    scale = float(jnp.max(jnp.abs(y_ref)))
    if err > 0.05 * (scale + 1.0):
        raise AssertionError(
            f"bf16 path error too large: max abs err={err}, peak |y_ref|={scale}")

    print("KERNEL_OK")
</pallas_src>

<mosaic_0001>
module attributes {stable_mosaic.version = 11 : i64} {
  func.func @_fused_kernel(%arg0: i32, %arg1: memref<1x4x256xf32, #tpu.memory_space<vmem>>, %arg2: memref<4x4xf32, #tpu.memory_space<vmem>>, %arg3: memref<4x1xf32, #tpu.memory_space<vmem>>, %arg4: memref<4x4xf32, #tpu.memory_space<vmem>>, %arg5: memref<4x1xf32, #tpu.memory_space<vmem>>, %arg6: memref<4x4xf32, #tpu.memory_space<vmem>>, %arg7: memref<4x1xf32, #tpu.memory_space<vmem>>, %arg8: memref<256x512xf32, #tpu.memory_space<vmem>>, %arg9: memref<4x1xf32, #tpu.memory_space<vmem>>, %arg10: memref<4x1xf32, #tpu.memory_space<vmem>>, %arg11: memref<4x1xf32, #tpu.memory_space<vmem>>, %arg12: memref<4x1xf32, #tpu.memory_space<vmem>>, %arg13: memref<4x4xf32, #tpu.memory_space<vmem>>, %arg14: memref<4x1xf32, #tpu.memory_space<vmem>>, %arg15: memref<1x4x256xf32, #tpu.memory_space<vmem>>) attributes {dimension_semantics = [#tpu.dimension_semantics<parallel>], iteration_bounds = array<i64: 2>, scalar_prefetch = 0 : i64, scratch_operands = 0 : i64, tpu.core_type = #tpu.core_type<tc>, window_params = [{transform_indices = @transform_0, window_bounds = array<i64: 1, 4, 256>}, {pipeline_mode = #tpu.pipeline_mode<synchronous>, transform_indices = @transform_1, window_bounds = array<i64: 4, 4>}, {pipeline_mode = #tpu.pipeline_mode<synchronous>, transform_indices = @transform_2, window_bounds = array<i64: 4, 1>}, {pipeline_mode = #tpu.pipeline_mode<synchronous>, transform_indices = @transform_3, window_bounds = array<i64: 4, 4>}, {pipeline_mode = #tpu.pipeline_mode<synchronous>, transform_indices = @transform_4, window_bounds = array<i64: 4, 1>}, {pipeline_mode = #tpu.pipeline_mode<synchronous>, transform_indices = @transform_5, window_bounds = array<i64: 4, 4>}, {pipeline_mode = #tpu.pipeline_mode<synchronous>, transform_indices = @transform_6, window_bounds = array<i64: 4, 1>}, {pipeline_mode = #tpu.pipeline_mode<synchronous>, transform_indices = @transform_7, window_bounds = array<i64: 256, 512>}, {pipeline_mode = #tpu.pipeline_mode<synchronous>, transform_indices = @transform_8, window_bounds = array<i64: 4, 1>}, {pipeline_mode = #tpu.pipeline_mode<synchronous>, transform_indices = @transform_9, window_bounds = array<i64: 4, 1>}, {pipeline_mode = #tpu.pipeline_mode<synchronous>, transform_indices = @transform_10, window_bounds = array<i64: 4, 1>}, {pipeline_mode = #tpu.pipeline_mode<synchronous>, transform_indices = @transform_11, window_bounds = array<i64: 4, 1>}, {pipeline_mode = #tpu.pipeline_mode<synchronous>, transform_indices = @transform_12, window_bounds = array<i64: 4, 4>}, {pipeline_mode = #tpu.pipeline_mode<synchronous>, transform_indices = @transform_13, window_bounds = array<i64: 4, 1>}, {transform_indices = @transform_14, window_bounds = array<i64: 1, 4, 256>}]} {
    %c0 = arith.constant 0 : index
    %c0_0 = arith.constant 0 : index
    %c0_1 = arith.constant 0 : index
    %0 = vector.load %arg1[%c0, %c0_0, %c0_1] : memref<1x4x256xf32, #tpu.memory_space<vmem>>, vector<1x4x256xf32>
    %1 = vector.shape_cast %0 : vector<1x4x256xf32> to vector<4x256xf32>
    %c0_2 = arith.constant 0 : index
    %c0_3 = arith.constant 0 : index
    %2 = vector.load %arg2[%c0_2, %c0_3] : memref<4x4xf32, #tpu.memory_space<vmem>>, vector<4x4xf32>
    %cst = arith.constant dense<0.000000e+00> : vector<4x256xf32>
    %3 = tpu.matmul %2, %1, %cst {dimension_numbers = #tpu.dot_dimension_numbers<[1], [0], [0], [1], [0, 0, 1, 1], [], []>} : vector<4x4xf32>, vector<4x256xf32>, vector<4x256xf32> -> vector<4x256xf32>
    %c0_4 = arith.constant 0 : index
    %c0_5 = arith.constant 0 : index
    %4 = vector.load %arg3[%c0_4, %c0_5] : memref<4x1xf32, #tpu.memory_space<vmem>>, vector<4x1xf32>
    %5 = vector.broadcast %4 : vector<4x1xf32> to vector<4x256xf32>
    %6 = arith.addf %3, %5 : vector<4x256xf32>
    %cst_6 = arith.constant 5.000000e-01 : f32
    %7 = vector.broadcast %cst_6 : f32 to vector<4x256xf32>
    %8 = arith.mulf %7, %6 : vector<4x256xf32>
    %cst_7 = arith.constant 0.707106769 : f32
    %9 = vector.broadcast %cst_7 : f32 to vector<4x256xf32>
    %10 = arith.mulf %6, %9 : vector<4x256xf32>
    %cst_8 = arith.constant 0.000000e+00 : f32
    %11 = vector.broadcast %cst_8 : f32 to vector<4x256xf32>
    %12 = arith.cmpf oge, %10, %11 : vector<4x256xf32>
    %cst_9 = arith.constant 1.000000e+00 : f32
    %cst_10 = arith.constant -1.000000e+00 : f32
    %13 = vector.broadcast %cst_9 : f32 to vector<4x256xf32>
    %14 = vector.broadcast %cst_10 : f32 to vector<4x256xf32>
    %15 = arith.select %12, %13, %14 : vector<4x256xi1>, vector<4x256xf32>
    %16 = math.absf %10 : vector<4x256xf32>
    %cst_11 = arith.constant 0.327591091 : f32
    %17 = vector.broadcast %cst_11 : f32 to vector<4x256xf32>
    %18 = arith.mulf %17, %16 : vector<4x256xf32>
    %cst_12 = arith.constant 1.000000e+00 : f32
    %19 = vector.broadcast %cst_12 : f32 to vector<4x256xf32>
    %20 = arith.addf %19, %18 : vector<4x256xf32>
    %cst_13 = arith.constant 1.000000e+00 : f32
    %21 = vector.broadcast %cst_13 : f32 to vector<4x256xf32>
    %22 = arith.divf %21, %20 : vector<4x256xf32>
    %cst_14 = arith.constant 1.06140542 : f32
    %23 = vector.broadcast %cst_14 : f32 to vector<4x256xf32>
    %24 = arith.mulf %23, %22 : vector<4x256xf32>
    %cst_15 = arith.constant -1.45315206 : f32
    %25 = vector.broadcast %cst_15 : f32 to vector<4x256xf32>
    %26 = arith.addf %24, %25 : vector<4x256xf32>
    %27 = arith.mulf %26, %22 : vector<4x256xf32>
    %cst_16 = arith.constant 1.42141378 : f32
    %28 = vector.broadcast %cst_16 : f32 to vector<4x256xf32>
    %29 = arith.addf %27, %28 : vector<4x256xf32>
    %30 = arith.mulf %29, %22 : vector<4x256xf32>
    %cst_17 = arith.constant -0.284496725 : f32
    %31 = vector.broadcast %cst_17 : f32 to vector<4x256xf32>
    %32 = arith.addf %30, %31 : vector<4x256xf32>
    %33 = arith.mulf %32, %22 : vector<4x256xf32>
    %cst_18 = arith.constant 0.254829586 : f32
    %34 = vector.broadcast %cst_18 : f32 to vector<4x256xf32>
    %35 = arith.addf %33, %34 : vector<4x256xf32>
    %36 = arith.mulf %35, %22 : vector<4x256xf32>
    %cst_19 = arith.constant 0.000000e+00 : f32
    %37 = vector.broadcast %cst_19 : f32 to vector<4x256xf32>
    %38 = arith.subf %37, %16 : vector<4x256xf32>
    %39 = arith.mulf %38, %16 : vector<4x256xf32>
    %40 = math.exp %39 : vector<4x256xf32>
    %41 = arith.mulf %36, %40 : vector<4x256xf32>
    %cst_20 = arith.constant 1.000000e+00 : f32
    %42 = vector.broadcast %cst_20 : f32 to vector<4x256xf32>
    %43 = arith.subf %42, %41 : vector<4x256xf32>
    %44 = arith.mulf %15, %43 : vector<4x256xf32>
    %cst_21 = arith.constant 1.000000e+00 : f32
    %45 = vector.broadcast %cst_21 : f32 to vector<4x256xf32>
    %46 = arith.addf %45, %44 : vector<4x256xf32>
    %47 = arith.mulf %8, %46 : vector<4x256xf32>
    %48 = math.absf %47 : vector<4x256xf32>
    %c0_22 = arith.constant 0 : index
    %c0_23 = arith.constant 0 : index
    %49 = vector.load %arg4[%c0_22, %c0_23] : memref<4x4xf32, #tpu.memory_space<vmem>>, vector<4x4xf32>
    %cst_24 = arith.constant dense<0.000000e+00> : vector<4x256xf32>
    %50 = tpu.matmul %49, %48, %cst_24 {dimension_numbers = #tpu.dot_dimension_numbers<[1], [0], [0], [1], [0, 0, 1, 1], [], []>} : vector<4x4xf32>, vector<4x256xf32>, vector<4x256xf32> -> vector<4x256xf32>
    %c0_25 = arith.constant 0 : index
    %c0_26 = arith.constant 0 : index
    %51 = vector.load %arg5[%c0_25, %c0_26] : memref<4x1xf32, #tpu.memory_space<vmem>>, vector<4x1xf32>
    %52 = vector.broadcast %51 : vector<4x1xf32> to vector<4x256xf32>
    %53 = arith.addf %50, %52 : vector<4x256xf32>
    %c0_27 = arith.constant 0 : index
    %c0_28 = arith.constant 0 : index
    %54 = vector.load %arg6[%c0_27, %c0_28] : memref<4x4xf32, #tpu.memory_space<vmem>>, vector<4x4xf32>
    %cst_29 = arith.constant dense<0.000000e+00> : vector<4x256xf32>
    %55 = tpu.matmul %54, %48, %cst_29 {dimension_numbers = #tpu.dot_dimension_numbers<[1], [0], [0], [1], [0, 0, 1, 1], [], []>} : vector<4x4xf32>, vector<4x256xf32>, vector<4x256xf32> -> vector<4x256xf32>
    %c0_30 = arith.constant 0 : index
    %c0_31 = arith.constant 0 : index
    %56 = vector.load %arg7[%c0_30, %c0_31] : memref<4x1xf32, #tpu.memory_space<vmem>>, vector<4x1xf32>
    %57 = vector.broadcast %56 : vector<4x1xf32> to vector<4x256xf32>
    %58 = arith.addf %55, %57 : vector<4x256xf32>
    %c0_32 = arith.constant 0 : index
    %c0_33 = arith.constant 0 : index
    %59 = vector.load %arg8[%c0_32, %c0_33] : memref<256x512xf32, #tpu.memory_space<vmem>>, vector<256x512xf32>
    %cst_34 = arith.constant dense<0.000000e+00> : vector<4x512xf32>
    %60 = tpu.matmul %58, %59, %cst_34 {dimension_numbers = #tpu.dot_dimension_numbers<[1], [0], [0], [1], [0, 0, 1, 1], [], []>} : vector<4x256xf32>, vector<256x512xf32>, vector<4x512xf32> -> vector<4x512xf32>
    %61 = vector.extract_strided_slice %60 {offsets = [0, 0], sizes = [4, 256], strides = [1, 1]} : vector<4x512xf32> to vector<4x256xf32>
    %62 = arith.mulf %53, %61 : vector<4x256xf32>
    %63 = vector.extract_strided_slice %60 {offsets = [0, 256], sizes = [4, 256], strides = [1, 1]} : vector<4x512xf32> to vector<4x256xf32>
    %64 = arith.mulf %53, %63 : vector<4x256xf32>
    %cst_35 = arith.constant dense<0.000000e+00> : vector<4x512xf32>
    %65 = tpu.matmul %62, %59, %cst_35 {dimension_numbers = #tpu.dot_dimension_numbers<[1], [0], [0], [1], [0, 0, 1, 1], [], []>} : vector<4x256xf32>, vector<256x512xf32>, vector<4x512xf32> -> vector<4x512xf32>
    %cst_36 = arith.constant dense<0.000000e+00> : vector<4x512xf32>
    %66 = tpu.matmul %64, %59, %cst_36 {dimension_numbers = #tpu.dot_dimension_numbers<[1], [0], [0], [1], [0, 0, 1, 1], [], []>} : vector<4x256xf32>, vector<256x512xf32>, vector<4x512xf32> -> vector<4x512xf32>
    %67 = vector.extract_strided_slice %65 {offsets = [0, 0], sizes = [4, 256], strides = [1, 1]} : vector<4x512xf32> to vector<4x256xf32>
    %68 = vector.extract_strided_slice %66 {offsets = [0, 256], sizes = [4, 256], strides = [1, 1]} : vector<4x512xf32> to vector<4x256xf32>
    %69 = arith.addf %67, %68 : vector<4x256xf32>
    %cst_37 = arith.constant 3.906250e-03 : f32
    %70 = vector.broadcast %cst_37 : f32 to vector<4x256xf32>
    %71 = arith.mulf %69, %70 : vector<4x256xf32>
    %72 = vector.extract_strided_slice %66 {offsets = [0, 0], sizes = [4, 256], strides = [1, 1]} : vector<4x512xf32> to vector<4x256xf32>
    %73 = vector.extract_strided_slice %65 {offsets = [0, 256], sizes = [4, 256], strides = [1, 1]} : vector<4x512xf32> to vector<4x256xf32>
    %74 = arith.subf %72, %73 : vector<4x256xf32>
    %cst_38 = arith.constant 3.906250e-03 : f32
    %75 = vector.broadcast %cst_38 : f32 to vector<4x256xf32>
    %76 = arith.mulf %74, %75 : vector<4x256xf32>
    %77 = arith.mulf %71, %71 : vector<4x256xf32>
    %78 = arith.mulf %76, %76 : vector<4x256xf32>
    %79 = arith.addf %77, %78 : vector<4x256xf32>
    %80 = math.sqrt %79 : vector<4x256xf32>
    %c0_39 = arith.constant 0 : index
    %c0_40 = arith.constant 0 : index
    %81 = vector.load %arg11[%c0_39, %c0_40] : memref<4x1xf32, #tpu.memory_space<vmem>>, vector<4x1xf32>
    %82 = vector.broadcast %81 : vector<4x1xf32> to vector<4x256xf32>
    %83 = arith.mulf %80, %82 : vector<4x256xf32>
    %c0_41 = arith.constant 0 : index
    %c0_42 = arith.constant 0 : index
    %84 = vector.load %arg12[%c0_41, %c0_42] : memref<4x1xf32, #tpu.memory_space<vmem>>, vector<4x1xf32>
    %85 = vector.broadcast %84 : vector<4x1xf32> to vector<4x256xf32>
    %86 = arith.mulf %48, %85 : vector<4x256xf32>
    %87 = arith.addf %83, %86 : vector<4x256xf32>
    %c0_43 = arith.constant 0 : index
    %c0_44 = arith.constant 0 : index
    %88 = vector.load %arg9[%c0_43, %c0_44] : memref<4x1xf32, #tpu.memory_space<vmem>>, vector<4x1xf32>
    %89 = vector.broadcast %88 : vector<4x1xf32> to vector<4x256xf32>
    %90 = arith.mulf %47, %89 : vector<4x256xf32>
    %c0_45 = arith.constant 0 : index
    %c0_46 = arith.constant 0 : index
    %91 = vector.load %arg10[%c0_45, %c0_46] : memref<4x1xf32, #tpu.memory_space<vmem>>, vector<4x1xf32>
    %92 = vector.broadcast %91 : vector<4x1xf32> to vector<4x256xf32>
    %93 = arith.addf %90, %92 : vector<4x256xf32>
    %94 = arith.addf %1, %93 : vector<4x256xf32>
    %95 = arith.addf %94, %87 : vector<4x256xf32>
    %cst_47 = arith.constant 0.000000e+00 : f32
    %96 = vector.broadcast %cst_47 : f32 to vector<4x256xf32>
    %97 = arith.maximumf %95, %96 : vector<4x256xf32>
    %c0_48 = arith.constant 0 : index
    %c0_49 = arith.constant 0 : index
    %98 = vector.load %arg13[%c0_48, %c0_49] : memref<4x4xf32, #tpu.memory_space<vmem>>, vector<4x4xf32>
    %cst_50 = arith.constant dense<0.000000e+00> : vector<4x256xf32>
    %99 = tpu.matmul %98, %97, %cst_50 {dimension_numbers = #tpu.dot_dimension_numbers<[1], [0], [0], [1], [0, 0, 1, 1], [], []>} : vector<4x4xf32>, vector<4x256xf32>, vector<4x256xf32> -> vector<4x256xf32>
    %c0_51 = arith.constant 0 : index
    %c0_52 = arith.constant 0 : index
    %100 = vector.load %arg14[%c0_51, %c0_52] : memref<4x1xf32, #tpu.memory_space<vmem>>, vector<4x1xf32>
    %101 = vector.broadcast %100 : vector<4x1xf32> to vector<4x256xf32>
    %102 = arith.addf %99, %101 : vector<4x256xf32>
    %c0_53 = arith.constant 0 : index
    %c0_54 = arith.constant 0 : index
    %c0_55 = arith.constant 0 : index
    %103 = vector.load %arg15[%c0_53, %c0_54, %c0_55] : memref<1x4x256xf32, #tpu.memory_space<vmem>>, vector<1x4x256xf32>
    %104 = vector.shape_cast %103 : vector<1x4x256xf32> to vector<4x256xf32>
    %105 = vector.shape_cast %102 : vector<4x256xf32> to vector<1x4x256xf32>
    tpu.vector_store %arg15[%c0_53, %c0_54, %c0_55], %105 {strides = array<i32>} : memref<1x4x256xf32, #tpu.memory_space<vmem>>, vector<1x4x256xf32>,
    return
  }
  func.func @transform_0(%arg0: i32) -> (i32, i32, i32) {
    %c0_i32 = arith.constant 0 : i32
    %c0_i32_0 = arith.constant 0 : i32
    %c0_i32_1 = arith.constant 0 : i32
    return %arg0, %c0_i32, %c0_i32_0 : i32, i32, i32
  }
  func.func @transform_1(%arg0: i32) -> (i32, i32) {
    %c0_i32 = arith.constant 0 : i32
    %c0_i32_0 = arith.constant 0 : i32
    %c0_i32_1 = arith.constant 0 : i32
    return %c0_i32, %c0_i32_0 : i32, i32
  }
  func.func @transform_2(%arg0: i32) -> (i32, i32) {
    %c0_i32 = arith.constant 0 : i32
    %c0_i32_0 = arith.constant 0 : i32
    %c0_i32_1 = arith.constant 0 : i32
    return %c0_i32, %c0_i32_0 : i32, i32
  }
  func.func @transform_3(%arg0: i32) -> (i32, i32) {
    %c0_i32 = arith.constant 0 : i32
    %c0_i32_0 = arith.constant 0 : i32
    %c0_i32_1 = arith.constant 0 : i32
    return %c0_i32, %c0_i32_0 : i32, i32
  }
  func.func @transform_4(%arg0: i32) -> (i32, i32) {
    %c0_i32 = arith.constant 0 : i32
    %c0_i32_0 = arith.constant 0 : i32
    %c0_i32_1 = arith.constant 0 : i32
    return %c0_i32, %c0_i32_0 : i32, i32
  }
  func.func @transform_5(%arg0: i32) -> (i32, i32) {
    %c0_i32 = arith.constant 0 : i32
    %c0_i32_0 = arith.constant 0 : i32
    %c0_i32_1 = arith.constant 0 : i32
    return %c0_i32, %c0_i32_0 : i32, i32
  }
  func.func @transform_6(%arg0: i32) -> (i32, i32) {
    %c0_i32 = arith.constant 0 : i32
    %c0_i32_0 = arith.constant 0 : i32
    %c0_i32_1 = arith.constant 0 : i32
    return %c0_i32, %c0_i32_0 : i32, i32
  }
  func.func @transform_7(%arg0: i32) -> (i32, i32) {
    %c0_i32 = arith.constant 0 : i32
    %c0_i32_0 = arith.constant 0 : i32
    %c0_i32_1 = arith.constant 0 : i32
    return %c0_i32, %c0_i32_0 : i32, i32
  }
  func.func @transform_8(%arg0: i32) -> (i32, i32) {
    %c0_i32 = arith.constant 0 : i32
    %c0_i32_0 = arith.constant 0 : i32
    %c0_i32_1 = arith.constant 0 : i32
    return %c0_i32, %c0_i32_0 : i32, i32
  }
  func.func @transform_9(%arg0: i32) -> (i32, i32) {
    %c0_i32 = arith.constant 0 : i32
    %c0_i32_0 = arith.constant 0 : i32
    %c0_i32_1 = arith.constant 0 : i32
    return %c0_i32, %c0_i32_0 : i32, i32
  }
  func.func @transform_10(%arg0: i32) -> (i32, i32) {
    %c0_i32 = arith.constant 0 : i32
    %c0_i32_0 = arith.constant 0 : i32
    %c0_i32_1 = arith.constant 0 : i32
    return %c0_i32, %c0_i32_0 : i32, i32
  }
  func.func @transform_11(%arg0: i32) -> (i32, i32) {
    %c0_i32 = arith.constant 0 : i32
    %c0_i32_0 = arith.constant 0 : i32
    %c0_i32_1 = arith.constant 0 : i32
    return %c0_i32, %c0_i32_0 : i32, i32
  }
  func.func @transform_12(%arg0: i32) -> (i32, i32) {
    %c0_i32 = arith.constant 0 : i32
    %c0_i32_0 = arith.constant 0 : i32
    %c0_i32_1 = arith.constant 0 : i32
    return %c0_i32, %c0_i32_0 : i32, i32
  }
  func.func @transform_13(%arg0: i32) -> (i32, i32) {
    %c0_i32 = arith.constant 0 : i32
    %c0_i32_0 = arith.constant 0 : i32
    %c0_i32_1 = arith.constant 0 : i32
    return %c0_i32, %c0_i32_0 : i32, i32
  }
  func.func @transform_14(%arg0: i32) -> (i32, i32, i32) {
    %c0_i32 = arith.constant 0 : i32
    %c0_i32_0 = arith.constant 0 : i32
    %c0_i32_1 = arith.constant 0 : i32
    return %arg0, %c0_i32, %c0_i32_0 : i32, i32, i32
  }
}

</mosaic_0001>

<llo_original>
// kernel: tpu_custom_call.1
$region0: #{tpu_custom_call.1}
  #allocation0 [shape = 'u32[]', space=smem, size = 0x4, offset = 0x4, fixed_abs, tag = 'smem constant byte address 0x4 - core index']
  #allocation1 [shape = 'u32[144,128]{1,0:T(1,128)}', space=vmem, size = 0x12000, scoped, tag = 'internal scratch']
  %s0 = inlined_call_operand.vmem [shape: f32[2,4,256], index: 0, kind: input, shape index: {}]
  %s1 = inlined_call_operand.vmem [shape: f32[4,4], index: 1, kind: input, shape index: {}]
  %s2 = inlined_call_operand.vmem [shape: f32[4,1], index: 2, kind: input, shape index: {}]
  %s3 = inlined_call_operand.vmem [shape: f32[4,4], index: 3, kind: input, shape index: {}]
  %s4 = inlined_call_operand.vmem [shape: f32[4,1], index: 4, kind: input, shape index: {}]
  %s5 = inlined_call_operand.vmem [shape: f32[4,4], index: 5, kind: input, shape index: {}]
  %s6 = inlined_call_operand.vmem [shape: f32[4,1], index: 6, kind: input, shape index: {}]
  %s7 = inlined_call_operand.hbm [shape: f32[256,512], index: 7, kind: input, shape index: {}]
  %s8 = inlined_call_operand.vmem [shape: f32[4,1], index: 8, kind: input, shape index: {}]
  %s9 = inlined_call_operand.vmem [shape: f32[4,1], index: 9, kind: input, shape index: {}]
  %s10 = inlined_call_operand.vmem [shape: f32[4,1], index: 10, kind: input, shape index: {}]
  %s11 = inlined_call_operand.vmem [shape: f32[4,1], index: 11, kind: input, shape index: {}]
  %s12 = inlined_call_operand.vmem [shape: f32[4,4], index: 12, kind: input, shape index: {}]
  %s13 = inlined_call_operand.vmem [shape: f32[4,1], index: 13, kind: input, shape index: {}]
  %s14 = inlined_call_operand.hbm [shape: f32[2,4,256], index: 14, kind: output, shape index: {}]
  %s15 = sld [smem:[#allocation0]]
  $region93: #{tpu_custom_call.1} parent=0
    _
  %s17 = ssub.s32 1, %s15
  %s18 = scalar_select 0, %s17, %s15
  $region1: #{tpu_custom_call.1} parent=0
    #allocation2 [shape = 'u8[524288]{0}', space=vmem, size = 0x80000, scoped, tag = 'input window, operand 7, single buffered']
    #allocation3 [shape = 's32[2]{0}', space=sflag, size = 0x8, scoped, tag = 'scoped memory for tpu_custom_call.1']
    #allocation4 [shape = 's32[2]{0}', space=sflag, size = 0x8, scoped, tag = 'scoped memory for tpu_custom_call.1']
    #allocation5 [shape = 'u8[8192]{0}', space=vmem, size = 0x2000, scoped, tag = 'output window, operand 0']
    %19 = vsyncpa [#allocation3], 0
    %20 = vsyncpa [#allocation4], 0
    %s21 = scalar_lea.sflag [#allocation4], 1
    %22 = vsyncpa %s21, 0
    loop: start=0, step=1, limit=4
    $region2: #{tpu_custom_call.1} parent=1 // loop_pre_header
      _
    $region3: #{tpu_custom_call.1} parent=1 // loop_header
      %s24 = sphi 0, %s28
      %p25 = scmp.ge.s32.totalorder %s24, 4
      %s34 = sphi 0, %s36
      %s37 = sphi 0, %s34
      %s38 = sphi 0, %s37
      %s54 = sphi 0, %s38
      %s58 = sphi 0, %s58
      %s60 = sphi 0, %s58
      %s61 = sphi 0, %s60
      %s75 = sphi 0, %s61
      %s79 = sphi 0, %s79
      %s81 = sphi 0, %s79
      %s82 = sphi 0, %s81
      %s96 = sphi 0, %s82
      %s100 = sphi 0, %s100
      %s102 = sphi 0, %s100
      %s103 = sphi 0, %s102
      %s117 = sphi 0, %s103
      %s121 = sphi 0, %s121
      %s123 = sphi 0, %s121
      %s124 = sphi 0, %s123
      %s138 = sphi 0, %s124
      %s142 = sphi 0, %s142
      %s144 = sphi 0, %s142
      %s145 = sphi 0, %s144
      %s159 = sphi 0, %s145
      %s163 = sphi 0, %s163
      %s165 = sphi 0, %s163
      %s166 = sphi 0, %s165
      %s180 = sphi 0, %s166
      %s184 = sphi 0, %s184
      %s186 = sphi 0, %s184
      %s187 = sphi 0, %s186
      %s201 = sphi 0, %s187
      %s205 = sphi 0, %s205
      %s207 = sphi 0, %s205
      %s208 = sphi 0, %s207
      %s222 = sphi 0, %s208
      %s226 = sphi 0, %s226
      %s228 = sphi 0, %s226
      %s229 = sphi 0, %s228
      %s243 = sphi 0, %s229
      %s247 = sphi 0, %s247
      %s249 = sphi 0, %s247
      %s250 = sphi 0, %s249
      %s264 = sphi 0, %s250
      %s268 = sphi 0, %s268
      %s270 = sphi 0, %s268
      %s271 = sphi 0, %s270
      %s285 = sphi 0, %s271
      %s289 = sphi 0, %s289
      %s291 = sphi 0, %s289
      %s292 = sphi 0, %s291
      %s306 = sphi 0, %s292
      %s310 = sphi 0, %s310
      %s312 = sphi 0, %s310
      %s313 = sphi 0, %s312
      %s327 = sphi 0, %s313
      %s333 = sphi 0, %s335
      %s336 = sphi 0, %s333
      %s337 = sphi 0, %s336
      %s353 = sphi 0, %s337
    $region4: #{tpu_custom_call.1} parent=1 // loop_header_branch
      %27 = sbr.rel (%p25) target = $region8
    $region5: #{tpu_custom_call.1} parent=1 // loop_body
      %s29 = ssub.s32 %s24, 1
      %s30 = ssub.s32 %s24, 2
      %s31 = sadd.s32 %s24, 1
      %s32 = ssub.s32 %s24, %s31
      %p33 = scmp.eq.s32.totalorder %s32, 0
      %s35 = sadd.s32 %s34, 1
      %s36 = scalar_select %p33, %s34, %s35
      %p39 = pneg %p33
      %p40 = scmp.eq.s32.totalorder %s24, 1
      %p41 = por %p39, %p40
      %p42 = scmp.ne.s32.totalorder %s34, %s37
      %p43 = scmp.eq.s32.totalorder %s24, 0
      %p44 = por %p42, %p43
      %p45 = scmp.ne.s32.totalorder %s34, %s37
      %p46 = scmp.eq.s32.totalorder %s29, 1
      %p47 = por %p45, %p46
      %p48 = scmp.ne.s32.totalorder %s37, %s38
      %p49 = scmp.eq.s32.totalorder %s29, 0
      %p50 = por %p48, %p49
      %p51 = scmp.ne.s32.totalorder %s37, %s38
      %p52 = scmp.eq.s32.totalorder %s30, 1
      %p53 = por %p51, %p52
      %p55 = scmp.ne.s32.totalorder %s38, %s54
      %p56 = scmp.eq.s32.totalorder %s30, 0
      %p57 = por %p55, %p56
      %s59 = sadd.s32 %s58, 1
      %p62 = scmp.eq.s32.totalorder %s24, 1
      %p63 = scmp.ne.s32.totalorder %s58, %s60
      %p64 = scmp.eq.s32.totalorder %s24, 0
      %p65 = por %p63, %p64
      %p66 = scmp.ne.s32.totalorder %s58, %s60
      %p67 = scmp.eq.s32.totalorder %s29, 1
      %p68 = por %p66, %p67
      %p69 = scmp.ne.s32.totalorder %s60, %s61
      %p70 = scmp.eq.s32.totalorder %s29, 0
      %p71 = por %p69, %p70
      %p72 = scmp.ne.s32.totalorder %s60, %s61
      %p73 = scmp.eq.s32.totalorder %s30, 1
      %p74 = por %p72, %p73
      %p76 = scmp.ne.s32.totalorder %s61, %s75
      %p77 = scmp.eq.s32.totalorder %s30, 0
      %p78 = por %p76, %p77
      %s80 = sadd.s32 %s79, 1
      %p83 = scmp.eq.s32.totalorder %s24, 1
      %p84 = scmp.ne.s32.totalorder %s79, %s81
      %p85 = scmp.eq.s32.totalorder %s24, 0
      %p86 = por %p84, %p85
      %p87 = scmp.ne.s32.totalorder %s79, %s81
      %p88 = scmp.eq.s32.totalorder %s29, 1
      %p89 = por %p87, %p88
      %p90 = scmp.ne.s32.totalorder %s81, %s82
      %p91 = scmp.eq.s32.totalorder %s29, 0
      %p92 = por %p90, %p91
      %p93 = scmp.ne.s32.totalorder %s81, %s82
      %p94 = scmp.eq.s32.totalorder %s30, 1
      %p95 = por %p93, %p94
      %p97 = scmp.ne.s32.totalorder %s82, %s96
      %p98 = scmp.eq.s32.totalorder %s30, 0
      %p99 = por %p97, %p98
      %s101 = sadd.s32 %s100, 1
      %p104 = scmp.eq.s32.totalorder %s24, 1
      %p105 = scmp.ne.s32.totalorder %s100, %s102
      %p106 = scmp.eq.s32.totalorder %s24, 0
      %p107 = por %p105, %p106
      %p108 = scmp.ne.s32.totalorder %s100, %s102
      %p109 = scmp.eq.s32.totalorder %s29, 1
      %p110 = por %p108, %p109
      %p111 = scmp.ne.s32.totalorder %s102, %s103
      %p112 = scmp.eq.s32.totalorder %s29, 0
      %p113 = por %p111, %p112
      %p114 = scmp.ne.s32.totalorder %s102, %s103
      %p115 = scmp.eq.s32.totalorder %s30, 1
      %p116 = por %p114, %p115
      %p118 = scmp.ne.s32.totalorder %s103, %s117
      %p119 = scmp.eq.s32.totalorder %s30, 0
      %p120 = por %p118, %p119
      %s122 = sadd.s32 %s121, 1
      %p125 = scmp.eq.s32.totalorder %s24, 1
      %p126 = scmp.ne.s32.totalorder %s121, %s123
      %p127 = scmp.eq.s32.totalorder %s24, 0
      %p128 = por %p126, %p127
      %p129 = scmp.ne.s32.totalorder %s121, %s123
      %p130 = scmp.eq.s32.totalorder %s29, 1
      %p131 = por %p129, %p130
      %p132 = scmp.ne.s32.totalorder %s123, %s124
      %p133 = scmp.eq.s32.totalorder %s29, 0
      %p134 = por %p132, %p133
      %p135 = scmp.ne.s32.totalorder %s123, %s124
      %p136 = scmp.eq.s32.totalorder %s30, 1
      %p137 = por %p135, %p136
      %p139 = scmp.ne.s32.totalorder %s124, %s138
      %p140 = scmp.eq.s32.totalorder %s30, 0
      %p141 = por %p139, %p140
      %s143 = sadd.s32 %s142, 1
      %p146 = scmp.eq.s32.totalorder %s24, 1
      %p147 = scmp.ne.s32.totalorder %s142, %s144
      %p148 = scmp.eq.s32.totalorder %s24, 0
      %p149 = por %p147, %p148
      %p150 = scmp.ne.s32.totalorder %s142, %s144
      %p151 = scmp.eq.s32.totalorder %s29, 1
      %p152 = por %p150, %p151
      %p153 = scmp.ne.s32.totalorder %s144, %s145
      %p154 = scmp.eq.s32.totalorder %s29, 0
      %p155 = por %p153, %p154
      %p156 = scmp.ne.s32.totalorder %s144, %s145
      %p157 = scmp.eq.s32.totalorder %s30, 1
      %p158 = por %p156, %p157
      %p160 = scmp.ne.s32.totalorder %s145, %s159
      %p161 = scmp.eq.s32.totalorder %s30, 0
      %p162 = por %p160, %p161
      %s164 = sadd.s32 %s163, 1
      %p167 = scmp.eq.s32.totalorder %s24, 1
      %p168 = scmp.ne.s32.totalorder %s163, %s165
      %p169 = scmp.eq.s32.totalorder %s24, 0
      %p170 = por %p168, %p169
      %p171 = scmp.ne.s32.totalorder %s163, %s165
      %p172 = scmp.eq.s32.totalorder %s29, 1
      %p173 = por %p171, %p172
      %p174 = scmp.ne.s32.totalorder %s165, %s166
      %p175 = scmp.eq.s32.totalorder %s29, 0
      %p176 = por %p174, %p175
      %p177 = scmp.ne.s32.totalorder %s165, %s166
      %p178 = scmp.eq.s32.totalorder %s30, 1
      %p179 = por %p177, %p178
      %p181 = scmp.ne.s32.totalorder %s166, %s180
      %p182 = scmp.eq.s32.totalorder %s30, 0
      %p183 = por %p181, %p182
      %s185 = sadd.s32 %s184, 1
      %p188 = scmp.eq.s32.totalorder %s24, 1
      %p189 = scmp.ne.s32.totalorder %s184, %s186
      %p190 = scmp.eq.s32.totalorder %s24, 0
      %p191 = por %p189, %p190
      %p192 = scmp.ne.s32.totalorder %s184, %s186
      %p193 = scmp.eq.s32.totalorder %s29, 1
      %p194 = por %p192, %p193
      %p195 = scmp.ne.s32.totalorder %s186, %s187
      %p196 = scmp.eq.s32.totalorder %s29, 0
      %p197 = por %p195, %p196
      %p198 = scmp.ne.s32.totalorder %s186, %s187
      %p199 = scmp.eq.s32.totalorder %s30, 1
      %p200 = por %p198, %p199
      %p202 = scmp.ne.s32.totalorder %s187, %s201
      %p203 = scmp.eq.s32.totalorder %s30, 0
      %p204 = por %p202, %p203
      %s206 = sadd.s32 %s205, 1
      %p209 = scmp.eq.s32.totalorder %s24, 1
      %p210 = scmp.ne.s32.totalorder %s205, %s207
      %p211 = scmp.eq.s32.totalorder %s24, 0
      %p212 = por %p210, %p211
      %p213 = scmp.ne.s32.totalorder %s205, %s207
      %p214 = scmp.eq.s32.totalorder %s29, 1
      %p215 = por %p213, %p214
      %p216 = scmp.ne.s32.totalorder %s207, %s208
      %p217 = scmp.eq.s32.totalorder %s29, 0
      %p218 = por %p216, %p217
      %p219 = scmp.ne.s32.totalorder %s207, %s208
      %p220 = scmp.eq.s32.totalorder %s30, 1
      %p221 = por %p219, %p220
      %p223 = scmp.ne.s32.totalorder %s208, %s222
      %p224 = scmp.eq.s32.totalorder %s30, 0
      %p225 = por %p223, %p224
      %s227 = sadd.s32 %s226, 1
      %p230 = scmp.eq.s32.totalorder %s24, 1
      %p231 = scmp.ne.s32.totalorder %s226, %s228
      %p232 = scmp.eq.s32.totalorder %s24, 0
      %p233 = por %p231, %p232
      %p234 = scmp.ne.s32.totalorder %s226, %s228
      %p235 = scmp.eq.s32.totalorder %s29, 1
      %p236 = por %p234, %p235
      %p237 = scmp.ne.s32.totalorder %s228, %s229
      %p238 = scmp.eq.s32.totalorder %s29, 0
      %p239 = por %p237, %p238
      %p240 = scmp.ne.s32.totalorder %s228, %s229
      %p241 = scmp.eq.s32.totalorder %s30, 1
      %p242 = por %p240, %p241
      %p244 = scmp.ne.s32.totalorder %s229, %s243
      %p245 = scmp.eq.s32.totalorder %s30, 0
      %p246 = por %p244, %p245
      %s248 = sadd.s32 %s247, 1
      %p251 = scmp.eq.s32.totalorder %s24, 1
      %p252 = scmp.ne.s32.totalorder %s247, %s249
      %p253 = scmp.eq.s32.totalorder %s24, 0
      %p254 = por %p252, %p253
      %p255 = scmp.ne.s32.totalorder %s247, %s249
      %p256 = scmp.eq.s32.totalorder %s29, 1
      %p257 = por %p255, %p256
      %p258 = scmp.ne.s32.totalorder %s249, %s250
      %p259 = scmp.eq.s32.totalorder %s29, 0
      %p260 = por %p258, %p259
      %p261 = scmp.ne.s32.totalorder %s249, %s250
      %p262 = scmp.eq.s32.totalorder %s30, 1
      %p263 = por %p261, %p262
      %p265 = scmp.ne.s32.totalorder %s250, %s264
      %p266 = scmp.eq.s32.totalorder %s30, 0
      %p267 = por %p265, %p266
      %s269 = sadd.s32 %s268, 1
      %p272 = scmp.eq.s32.totalorder %s24, 1
      %p273 = scmp.ne.s32.totalorder %s268, %s270
      %p274 = scmp.eq.s32.totalorder %s24, 0
      %p275 = por %p273, %p274
      %p276 = scmp.ne.s32.totalorder %s268, %s270
      %p277 = scmp.eq.s32.totalorder %s29, 1
      %p278 = por %p276, %p277
      %p279 = scmp.ne.s32.totalorder %s270, %s271
      %p280 = scmp.eq.s32.totalorder %s29, 0
      %p281 = por %p279, %p280
      %p282 = scmp.ne.s32.totalorder %s270, %s271
      %p283 = scmp.eq.s32.totalorder %s30, 1
      %p284 = por %p282, %p283
      %p286 = scmp.ne.s32.totalorder %s271, %s285
      %p287 = scmp.eq.s32.totalorder %s30, 0
      %p288 = por %p286, %p287
      %s290 = sadd.s32 %s289, 1
      %p293 = scmp.eq.s32.totalorder %s24, 1
      %p294 = scmp.ne.s32.totalorder %s289, %s291
      %p295 = scmp.eq.s32.totalorder %s24, 0
      %p296 = por %p294, %p295
      %p297 = scmp.ne.s32.totalorder %s289, %s291
      %p298 = scmp.eq.s32.totalorder %s29, 1
      %p299 = por %p297, %p298
      %p300 = scmp.ne.s32.totalorder %s291, %s292
      %p301 = scmp.eq.s32.totalorder %s29, 0
      %p302 = por %p300, %p301
      %p303 = scmp.ne.s32.totalorder %s291, %s292
      %p304 = scmp.eq.s32.totalorder %s30, 1
      %p305 = por %p303, %p304
      %p307 = scmp.ne.s32.totalorder %s292, %s306
      %p308 = scmp.eq.s32.totalorder %s30, 0
      %p309 = por %p307, %p308
      %s311 = sadd.s32 %s310, 1
      %p314 = scmp.eq.s32.totalorder %s24, 1
      %p315 = scmp.ne.s32.totalorder %s310, %s312
      %p316 = scmp.eq.s32.totalorder %s24, 0
      %p317 = por %p315, %p316
      %p318 = scmp.ne.s32.totalorder %s310, %s312
      %p319 = scmp.eq.s32.totalorder %s29, 1
      %p320 = por %p318, %p319
      %p321 = scmp.ne.s32.totalorder %s312, %s313
      %p322 = scmp.eq.s32.totalorder %s29, 0
      %p323 = por %p321, %p322
      %p324 = scmp.ne.s32.totalorder %s312, %s313
      %p325 = scmp.eq.s32.totalorder %s30, 1
      %p326 = por %p324, %p325
      %p328 = scmp.ne.s32.totalorder %s313, %s327
      %p329 = scmp.eq.s32.totalorder %s30, 0
      %p330 = por %p328, %p329
      %s331 = ssub.s32 %s24, %s31
      %p332 = scmp.eq.s32.totalorder %s331, 0
      %s334 = sadd.s32 %s333, 1
      %s335 = scalar_select %p332, %s333, %s334
      %p338 = pneg %p332
      %p339 = scmp.eq.s32.totalorder %s24, 1
      %p340 = por %p338, %p339
      %p341 = scmp.ne.s32.totalorder %s333, %s336
      %p342 = scmp.eq.s32.totalorder %s24, 0
      %p343 = por %p341, %p342
      %p344 = scmp.ne.s32.totalorder %s333, %s336
      %p345 = scmp.eq.s32.totalorder %s29, 1
      %p346 = por %p344, %p345
      %p347 = scmp.ne.s32.totalorder %s336, %s337
      %p348 = scmp.eq.s32.totalorder %s29, 0
      %p349 = por %p347, %p348
      %p350 = scmp.ne.s32.totalorder %s336, %s337
      %p351 = scmp.eq.s32.totalorder %s30, 1
      %p352 = por %p350, %p351
      %p354 = scmp.ne.s32.totalorder %s337, %s353
      %p355 = scmp.eq.s32.totalorder %s30, 0
      %p356 = por %p354, %p355
      %p357 = scmp.le.s32.totalorder 1, %s24
      %p358 = scmp.lt.s32.totalorder %s24, 3
      %p359 = pnand %p357, %p358
      %p360 = pneg %p359
      // Predicated region
      $region9: #{tpu_custom_call.1} parent=5 // pred_check
        _
      $region10: #{tpu_custom_call.1} parent=5 // pred_check_branch
        %362 = sbr.rel (%p359) target = $region12
      $region11: #{tpu_custom_call.1} parent=5 // pred_region
        %s363 = ssub.s32 %s24, 1
        // Predicated region
        $region13: #{tpu_custom_call.1} parent=11 // pred_check
          %p364 = pneg %p71
        $region14: #{tpu_custom_call.1} parent=11 // pred_check_branch
          %366 = sbr.rel (%p364) target = $region16
        $region15: #{tpu_custom_call.1} parent=11 // pred_region
          _
        $region16: #{tpu_custom_call.1} parent=11 // pred_fallthru
          _
        // Predicated region
        $region17: #{tpu_custom_call.1} parent=11 // pred_check
          %p367 = pneg %p92
        $region18: #{tpu_custom_call.1} parent=11 // pred_check_branch
          %369 = sbr.rel (%p367) target = $region20
        $region19: #{tpu_custom_call.1} parent=11 // pred_region
          _
        $region20: #{tpu_custom_call.1} parent=11 // pred_fallthru
          _
        // Predicated region
        $region21: #{tpu_custom_call.1} parent=11 // pred_check
          %p370 = pneg %p113
        $region22: #{tpu_custom_call.1} parent=11 // pred_check_branch
          %372 = sbr.rel (%p370) target = $region24
        $region23: #{tpu_custom_call.1} parent=11 // pred_region
          _
        $region24: #{tpu_custom_call.1} parent=11 // pred_fallthru
          _
        // Predicated region
        $region25: #{tpu_custom_call.1} parent=11 // pred_check
          %p373 = pneg %p134
        $region26: #{tpu_custom_call.1} parent=11 // pred_check_branch
          %375 = sbr.rel (%p373) target = $region28
        $region27: #{tpu_custom_call.1} parent=11 // pred_region
          _
        $region28: #{tpu_custom_call.1} parent=11 // pred_fallthru
          _
        // Predicated region
        $region29: #{tpu_custom_call.1} parent=11 // pred_check
          %p376 = pneg %p155
        $region30: #{tpu_custom_call.1} parent=11 // pred_check_branch
          %378 = sbr.rel (%p376) target = $region32
        $region31: #{tpu_custom_call.1} parent=11 // pred_region
          _
        $region32: #{tpu_custom_call.1} parent=11 // pred_fallthru
          _
        // Predicated region
        $region33: #{tpu_custom_call.1} parent=11 // pred_check
          %p379 = pneg %p176
        $region34: #{tpu_custom_call.1} parent=11 // pred_check_branch
          %381 = sbr.rel (%p379) target = $region36
        $region35: #{tpu_custom_call.1} parent=11 // pred_region
          _
        $region36: #{tpu_custom_call.1} parent=11 // pred_fallthru
          _
        // Predicated region
        $region37: #{tpu_custom_call.1} parent=11 // pred_check
          %p382 = pneg %p197
        $region38: #{tpu_custom_call.1} parent=11 // pred_check_branch
          %384 = sbr.rel (%p382) target = $region40
        $region39: #{tpu_custom_call.1} parent=11 // pred_region
          %s386 = ssub.s32 16384, 16384
          %387 = vsyncadd [#allocation3], %s386
          %s388 = sshll.u32 [#allocation2], 4
          %s389 = int_to_ptr.vmem [resolvable:$true] %s388
          %394 = dma.hbm_to_vmem [thread:$0]  %s7, 16384, %s389, [#allocation3], 512, 512, 32
        $region40: #{tpu_custom_call.1} parent=11 // pred_fallthru
          _
        // Predicated region
        $region41: #{tpu_custom_call.1} parent=11 // pred_check
          %p395 = pneg %p218
        $region42: #{tpu_custom_call.1} parent=11 // pred_check_branch
          %397 = sbr.rel (%p395) target = $region44
        $region43: #{tpu_custom_call.1} parent=11 // pred_region
          _
        $region44: #{tpu_custom_call.1} parent=11 // pred_fallthru
          _
        // Predicated region
        $region45: #{tpu_custom_call.1} parent=11 // pred_check
          %p398 = pneg %p239
        $region46: #{tpu_custom_call.1} parent=11 // pred_check_branch
          %400 = sbr.rel (%p398) target = $region48
        $region47: #{tpu_custom_call.1} parent=11 // pred_region
          _
        $region48: #{tpu_custom_call.1} parent=11 // pred_fallthru
          _
        // Predicated region
        $region49: #{tpu_custom_call.1} parent=11 // pred_check
          %p401 = pneg %p260
        $region50: #{tpu_custom_call.1} parent=11 // pred_check_branch
          %403 = sbr.rel (%p401) target = $region52
        $region51: #{tpu_custom_call.1} parent=11 // pred_region
          _
        $region52: #{tpu_custom_call.1} parent=11 // pred_fallthru
          _
        // Predicated region
        $region53: #{tpu_custom_call.1} parent=11 // pred_check
          %p404 = pneg %p281
        $region54: #{tpu_custom_call.1} parent=11 // pred_check_branch
          %406 = sbr.rel (%p404) target = $region56
        $region55: #{tpu_custom_call.1} parent=11 // pred_region
          _
        $region56: #{tpu_custom_call.1} parent=11 // pred_fallthru
          _
        // Predicated region
        $region57: #{tpu_custom_call.1} parent=11 // pred_check
          %p407 = pneg %p302
        $region58: #{tpu_custom_call.1} parent=11 // pred_check_branch
          %409 = sbr.rel (%p407) target = $region60
        $region59: #{tpu_custom_call.1} parent=11 // pred_region
          _
        $region60: #{tpu_custom_call.1} parent=11 // pred_fallthru
          _
        // Predicated region
        $region61: #{tpu_custom_call.1} parent=11 // pred_check
          %p410 = pneg %p323
        $region62: #{tpu_custom_call.1} parent=11 // pred_check_branch
          %412 = sbr.rel (%p410) target = $region64
        $region63: #{tpu_custom_call.1} parent=11 // pred_region
          _
        $region64: #{tpu_custom_call.1} parent=11 // pred_fallthru
          _
      $region12: #{tpu_custom_call.1} parent=5 // pred_fallthru
        _
      %p413 = scmp.lt.s32.totalorder %s24, 2
      // Predicated region
      $region65: #{tpu_custom_call.1} parent=5 // pred_check
        %p414 = pneg %p413
      $region66: #{tpu_custom_call.1} parent=5 // pred_check_branch
        %416 = sbr.rel (%p414) target = $region68
      $region67: #{tpu_custom_call.1} parent=5 // pred_region
        // Predicated region
        $region69: #{tpu_custom_call.1} parent=67 // pred_check
          %p417 = pneg %p44
        $region70: #{tpu_custom_call.1} parent=67 // pred_check_branch
          %419 = sbr.rel (%p417) target = $region72
        $region71: #{tpu_custom_call.1} parent=67 // pred_region
          %p420 = scmp.lt.s32.totalorder %s24, 1
          %s421 = scalar_select %p420, %s24, 1
          %s422 = smul.addr %s421, 2
          %s423 = smul.addr %s422, 4
          %s424 = scalar_lea.vmem %s0, %s423
        $region72: #{tpu_custom_call.1} parent=67 // pred_fallthru
          _
      $region68: #{tpu_custom_call.1} parent=5 // pred_fallthru
        _
      %p425 = scmp.le.s32.totalorder 1, %s24
      %p426 = scmp.lt.s32.totalorder %s24, 3
      %p427 = pnand %p425, %p426
      %p428 = pneg %p427
      // Predicated region
      $region73: #{tpu_custom_call.1} parent=5 // pred_check
        _
      $region74: #{tpu_custom_call.1} parent=5 // pred_check_branch
        %430 = sbr.rel (%p427) target = $region76
      $region75: #{tpu_custom_call.1} parent=5 // pred_region
        %s431 = ssub.s32 %s24, 1
        // Predicated region
        $region77: #{tpu_custom_call.1} parent=75 // pred_check
          %p432 = pneg %p197
        $region78: #{tpu_custom_call.1} parent=75 // pred_check_branch
          %434 = sbr.rel (%p432) target = $region80
        $region79: #{tpu_custom_call.1} parent=75 // pred_region
          %435 = dma.done [#allocation3], 16384
        $region80: #{tpu_custom_call.1} parent=75 // pred_fallthru
          _
        %p436 = scmp.lt.s32.totalorder %s29, 1
        %s437 = scalar_select %p436, %s29, 1
        %s438 = smul.addr %s437, 2
        %s439 = smul.addr %s438, 4
        %s440 = scalar_lea.vmem %s0, %s439
        %p441 = pneg %p50
        %p442 = pneg %p47
        %p443 = pneg %p71
        %p444 = pneg %p68
        %p445 = pneg %p92
        %p446 = pneg %p89
        %p447 = pneg %p113
        %p448 = pneg %p110
        %p449 = pneg %p134
        %p450 = pneg %p131
        %p451 = pneg %p155
        %p452 = pneg %p152
        %p453 = pneg %p176
        %p454 = pneg %p173
        %p455 = pneg %p197
        %p456 = pneg %p194
        %p457 = pneg %p218
        %p458 = pneg %p215
        %p459 = pneg %p239
        %p460 = pneg %p236
        %p461 = pneg %p260
        %p462 = pneg %p257
        %p463 = pneg %p281
        %p464 = pneg %p278
        %p465 = pneg %p302
        %p466 = pneg %p299
        %p467 = pneg %p323
        %p468 = pneg %p320
        %p469 = pneg %p349
        %p470 = pneg %p346
        %s471 = sand.u32 %s336, 1
        %s472 = scalar_lea.sflag [#allocation4], %s471
        %s473 = sand.u32 %s336, 1
        %s474 = smul.addr %s473, 8
        %s475 = scalar_lea.vmem [#allocation5], %s474
        %p476 = scmp.lt.s32.totalorder %s29, 1
        %s477 = scalar_select %p476, %s29, 1
        %s478 = smul.addr %s477, 2
        %s479 = smul.addr %s478, 4
        %s480 = scalar_lea.vmem %s0, %s479
        %v481 = vld [vmem:[%s480] sm:$0xff]
        %v482 = vld [vmem:[%s1] sm:$0xf]
        %v483 = vld [vmem:[%s2] sm:$0xf]
        %485 = vset.pattern.permute.xlu0 0
        %486 = vperm.xlu0 %485, %v483
        %v487 = vpop.permute.xlu0 %486
        %v490 = vcombine.high %v481, %v481
        %vm491 = vcmask 31744
        %v493 = vsel %vm491, %v482, 0
        %vm495 = vcmask 1043456
        %v496 = vsel %vm495, %v481, 0
        %v498 = vsel %vm495, %v490, 0
        %500 = vmatprep.subr.mxu0 %v498
        %501 = vmatpush1.msra.mxu0 %v496
        %502 = vmatprep.subr.mxu0 0.0
        %503 = vmatpush1.msra.mxu0 0.0
        %504 = vmatprep.subr.mxu0 0.0
        %505 = vmatpush1.msra.mxu0 0.0
        %506 = vmatprep.subr.mxu0 0.0
        %507 = vmatpush1.msra.mxu0 0.0
        %508 = vmatprep.subr.mxu0 0.0
        %509 = vmatpush1.msra.mxu0 0.0
        %510 = vmatprep.subr.mxu0 0.0
        %511 = vmatpush1.msra.mxu0 0.0
        %512 = vmatprep.subr.mxu0 0.0
        %513 = vmatpush1.msra.mxu0 0.0
        %514 = vmatprep.subr.mxu0 0.0
        %515 = vmatpush1.msra.mxu0 0.0
        %516 = vmatprep.subr.mxu0 0.0
        %517 = vmatpush1.msra.mxu0 0.0
        %518 = vmatprep.subr.mxu0 0.0
        %519 = vmatpush1.msra.mxu0 0.0
        %520 = vmatprep.subr.mxu0 0.0
        %521 = vmatpush1.msra.mxu0 0.0
        %522 = vmatprep.subr.mxu0 0.0
        %523 = vmatpush1.msra.mxu0 0.0
        %524 = vmatprep.subr.mxu0 0.0
        %525 = vmatpush1.msra.mxu0 0.0
        %526 = vmatprep.subr.mxu0 0.0
        %527 = vmatpush1.msra.mxu0 0.0
        %528 = vmatprep.subr.mxu0 0.0
        %529 = vmatpush1.msra.mxu0 0.0
        %530 = vmatprep.subr.mxu0 0.0
        %531 = vmatpush1.msra.mxu0 0.0
        %532 = vmatprep.subr.mxu0 0.0
        %533 = vmatpush1.msra.mxu0 0.0
        %534 = vmatprep.subr.mxu0 0.0
        %535 = vmatpush1.msra.mxu0 0.0
        %536 = vmatprep.subr.mxu0 0.0
        %537 = vmatpush1.msra.mxu0 0.0
        %538 = vmatprep.subr.mxu0 0.0
        %539 = vmatpush1.msra.mxu0 0.0
        %540 = vmatprep.subr.mxu0 0.0
        %541 = vmatpush1.msra.mxu0 0.0
        %542 = vmatprep.subr.mxu0 0.0
        %543 = vmatpush1.msra.mxu0 0.0
        %544 = vmatprep.subr.mxu0 0.0
        %545 = vmatpush1.msra.mxu0 0.0
        %546 = vmatprep.subr.mxu0 0.0
        %547 = vmatpush1.msra.mxu0 0.0
        %548 = vmatprep.subr.mxu0 0.0
        %549 = vmatpush1.msra.mxu0 0.0
        %550 = vmatprep.subr.mxu0 0.0
        %551 = vmatpush1.msra.mxu0 0.0
        %552 = vmatprep.subr.mxu0 0.0
        %553 = vmatpush1.msra.mxu0 0.0
        %554 = vmatprep.subr.mxu0 0.0
        %555 = vmatpush1.msra.mxu0 0.0
        %556 = vmatprep.subr.mxu0 0.0
        %557 = vmatpush1.msra.mxu0 0.0
        %558 = vmatprep.subr.mxu0 0.0
        %559 = vmatpush1.msra.mxu0 0.0
        %560 = vmatprep.subr.mxu0 0.0
        %561 = vmatpush1.msra.mxu0 0.0
        %562 = vmatprep.subr.mxu0 0.0
        %563 = vmatpush1.msra.mxu0 0.0
        %564 = vmatprep.mubr.f32.mxu0 0.0
        %565 = vmatmul.mubr.f32.gmra.mrb[0].mxu0 %v493
        %v566 = vpop.f32.mrb[0].mxu0
        %v567 = vadd.f32 %v487, %v566
        %v568 = vpop.f32.mrb[0].mxu0
        %v569 = vadd.f32 %v487, %v568
        %570 = vdwg.mxu0
        %v571 = vmul.f32 %v567, 0.5
        %v572 = vmul.f32 %v569, 0.5
        %v573 = vmul.f32 %v567, 0.70710677
        %v574 = vmul.f32 %v569, 0.70710677
        %vm575 = vcmp.ge.f32.partialorder %v573, 0.0
        %vm576 = vcmp.ge.f32.partialorder %v574, 0.0
        %v577 = vsel %vm575, 1.0, -1.0
        %v578 = vsel %vm576, 1.0, -1.0
        %v579 = vand.u32 2147483647, %v573
        %v580 = vand.u32 2147483647, %v574
        %v581 = vmul.f32 %v579, 0.3275911
        %v582 = vmul.f32 %v580, 0.3275911
        %v583 = vadd.f32 %v581, 1.0
        %v584 = vadd.f32 %v582, 1.0
        %v585 = vrcp.pop %v583
        %v586 = vmul.f32 1.0, %v585
        %v587 = vrcp.pop %v584
        %v588 = vmul.f32 1.0, %v587
        %v589 = vmul.f32 %v586, 1.0614054
        %v590 = vmul.f32 %v588, 1.0614054
        %v591 = vadd.f32 %v589, -1.4531521
        %v592 = vadd.f32 %v590, -1.4531521
        %v593 = vmul.f32 %v591, %v586
        %v594 = vmul.f32 %v592, %v588
        %v595 = vadd.f32 %v593, 1.4214138
        %v596 = vadd.f32 %v594, 1.4214138
        %v597 = vmul.f32 %v595, %v586
        %v598 = vmul.f32 %v596, %v588
        %v599 = vadd.f32 %v597, -0.28449672
        %v600 = vadd.f32 %v598, -0.28449672
        %v601 = vmul.f32 %v599, %v586
        %v602 = vmul.f32 %v600, %v588
        %v603 = vadd.f32 %v601, 0.2548296
        %v604 = vadd.f32 %v602, 0.2548296
        %v605 = vmul.f32 %v603, %v586
        %v606 = vmul.f32 %v604, %v588
        %v607 = vsub.f32 0.0, %v579
        %v608 = vsub.f32 0.0, %v580
        %v609 = vmul.f32 %v607, %v579
        %v610 = vmul.f32 %v608, %v580
        %v611 = vmul.f32 %v609, 1.442695
        %v612 = vpow.pop %v611
        %v613 = vmul.f32 %v610, 1.442695
        %v614 = vpow.pop %v613
        %v615 = vmul.f32 %v605, %v612
        %v616 = vmul.f32 %v606, %v614
        %v617 = vsub.f32 1.0, %v615
        %v618 = vsub.f32 1.0, %v616
        %v619 = vmul.f32 %v577, %v617
        %v620 = vmul.f32 %v578, %v618
        %v621 = vadd.f32 %v619, 1.0
        %v622 = vadd.f32 %v620, 1.0
        %v623 = vmul.f32 %v571, %v621
        %v624 = vmul.f32 %v572, %v622
        %v625 = vand.u32 2147483647, %v623
        %v626 = vand.u32 2147483647, %v624
        %v627 = vld [vmem:[%s3] sm:$0xf]
        %v628 = vld [vmem:[%s4] sm:$0xf]
        %630 = vset.pattern.permute.xlu0 0
        %631 = vperm.xlu0 %630, %v628
        %v632 = vpop.permute.xlu0 %631
        %v635 = vsel %vm491, %v627, 0
        %v638 = vsel %vm495, %v625, 0
        %v641 = vsel %vm495, %v626, 0
        %643 = vmatprep.subr.mxu0 %v641
        %644 = vmatpush1.msra.mxu0 %v638
        %645 = vmatprep.subr.mxu0 0.0
        %646 = vmatpush1.msra.mxu0 0.0
        %647 = vmatprep.subr.mxu0 0.0
        %648 = vmatpush1.msra.mxu0 0.0
        %649 = vmatprep.subr.mxu0 0.0
        %650 = vmatpush1.msra.mxu0 0.0
        %651 = vmatprep.subr.mxu0 0.0
        %652 = vmatpush1.msra.mxu0 0.0
        %653 = vmatprep.subr.mxu0 0.0
        %654 = vmatpush1.msra.mxu0 0.0
        %655 = vmatprep.subr.mxu0 0.0
        %656 = vmatpush1.msra.mxu0 0.0
        %657 = vmatprep.subr.mxu0 0.0
        %658 = vmatpush1.msra.mxu0 0.0
        %659 = vmatprep.subr.mxu0 0.0
        %660 = vmatpush1.msra.mxu0 0.0
        %661 = vmatprep.subr.mxu0 0.0
        %662 = vmatpush1.msra.mxu0 0.0
        %663 = vmatprep.subr.mxu0 0.0
        %664 = vmatpush1.msra.mxu0 0.0
        %665 = vmatprep.subr.mxu0 0.0
        %666 = vmatpush1.msra.mxu0 0.0
        %667 = vmatprep.subr.mxu0 0.0
        %668 = vmatpush1.msra.mxu0 0.0
        %669 = vmatprep.subr.mxu0 0.0
        %670 = vmatpush1.msra.mxu0 0.0
        %671 = vmatprep.subr.mxu0 0.0
        %672 = vmatpush1.msra.mxu0 0.0
        %673 = vmatprep.subr.mxu0 0.0
        %674 = vmatpush1.msra.mxu0 0.0
        %675 = vmatprep.subr.mxu0 0.0
        %676 = vmatpush1.msra.mxu0 0.0
        %677 = vmatprep.subr.mxu0 0.0
        %678 = vmatpush1.msra.mxu0 0.0
        %679 = vmatprep.subr.mxu0 0.0
        %680 = vmatpush1.msra.mxu0 0.0
        %681 = vmatprep.subr.mxu0 0.0
        %682 = vmatpush1.msra.mxu0 0.0
        %683 = vmatprep.subr.mxu0 0.0
        %684 = vmatpush1.msra.mxu0 0.0
        %685 = vmatprep.subr.mxu0 0.0
        %686 = vmatpush1.msra.mxu0 0.0
        %687 = vmatprep.subr.mxu0 0.0
        %688 = vmatpush1.msra.mxu0 0.0
        %689 = vmatprep.subr.mxu0 0.0
        %690 = vmatpush1.msra.mxu0 0.0
        %691 = vmatprep.subr.mxu0 0.0
        %692 = vmatpush1.msra.mxu0 0.0
        %693 = vmatprep.subr.mxu0 0.0
        %694 = vmatpush1.msra.mxu0 0.0
        %695 = vmatprep.subr.mxu0 0.0
        %696 = vmatpush1.msra.mxu0 0.0
        %697 = vmatprep.subr.mxu0 0.0
        %698 = vmatpush1.msra.mxu0 0.0
        %699 = vmatprep.subr.mxu0 0.0
        %700 = vmatpush1.msra.mxu0 0.0
        %701 = vmatprep.subr.mxu0 0.0
        %702 = vmatpush1.msra.mxu0 0.0
        %703 = vmatprep.subr.mxu0 0.0
        %704 = vmatpush1.msra.mxu0 0.0
        %705 = vmatprep.subr.mxu0 0.0
        %706 = vmatpush1.msra.mxu0 0.0
        %707 = vmatprep.mubr.f32.mxu0 0.0
        %708 = vmatmul.mubr.f32.gmra.mrb[0].mxu0 %v635
        %v709 = vpop.f32.mrb[0].mxu0
        %v710 = vadd.f32 %v632, %v709
        %v711 = vpop.f32.mrb[0].mxu0
        %v712 = vadd.f32 %v632, %v711
        %713 = vdwg.mxu0
        %v714 = vld [vmem:[%s5] sm:$0xf]
        %v715 = vld [vmem:[%s6] sm:$0xf]
        %717 = vset.pattern.permute.xlu0 0
        %718 = vperm.xlu0 %717, %v715
        %v719 = vpop.permute.xlu0 %718
        %v722 = vsel %vm491, %v714, 0
        %724 = vmatprep.subr.mxu0 %v641
        %725 = vmatpush1.msra.mxu0 %v638
        %726 = vmatprep.subr.mxu0 0.0
        %727 = vmatpush1.msra.mxu0 0.0
        %728 = vmatprep.subr.mxu0 0.0
        %729 = vmatpush1.msra.mxu0 0.0
        %730 = vmatprep.subr.mxu0 0.0
        %731 = vmatpush1.msra.mxu0 0.0
        %732 = vmatprep.subr.mxu0 0.0
        %733 = vmatpush1.msra.mxu0 0.0
        %734 = vmatprep.subr.mxu0 0.0
        %735 = vmatpush1.msra.mxu0 0.0
        %736 = vmatprep.subr.mxu0 0.0
        %737 = vmatpush1.msra.mxu0 0.0
        %738 = vmatprep.subr.mxu0 0.0
        %739 = vmatpush1.msra.mxu0 0.0
        %740 = vmatprep.subr.mxu0 0.0
        %741 = vmatpush1.msra.mxu0 0.0
        %742 = vmatprep.subr.mxu0 0.0
        %743 = vmatpush1.msra.mxu0 0.0
        %744 = vmatprep.subr.mxu0 0.0
        %745 = vmatpush1.msra.mxu0 0.0
        %746 = vmatprep.subr.mxu0 0.0
        %747 = vmatpush1.msra.mxu0 0.0
        %748 = vmatprep.subr.mxu0 0.0
        %749 = vmatpush1.msra.mxu0 0.0
        %750 = vmatprep.subr.mxu0 0.0
        %751 = vmatpush1.msra.mxu0 0.0
        %752 = vmatprep.subr.mxu0 0.0
        %753 = vmatpush1.msra.mxu0 0.0
        %754 = vmatprep.subr.mxu0 0.0
        %755 = vmatpush1.msra.mxu0 0.0
        %756 = vmatprep.subr.mxu0 0.0
        %757 = vmatpush1.msra.mxu0 0.0
        %758 = vmatprep.subr.mxu0 0.0
        %759 = vmatpush1.msra.mxu0 0.0
        %760 = vmatprep.subr.mxu0 0.0
        %761 = vmatpush1.msra.mxu0 0.0
        %762 = vmatprep.subr.mxu0 0.0
        %763 = vmatpush1.msra.mxu0 0.0
        %764 = vmatprep.subr.mxu0 0.0
        %765 = vmatpush1.msra.mxu0 0.0
        %766 = vmatprep.subr.mxu0 0.0
        %767 = vmatpush1.msra.mxu0 0.0
        %768 = vmatprep.subr.mxu0 0.0
        %769 = vmatpush1.msra.mxu0 0.0
        %770 = vmatprep.subr.mxu0 0.0
        %771 = vmatpush1.msra.mxu0 0.0
        %772 = vmatprep.subr.mxu0 0.0
        %773 = vmatpush1.msra.mxu0 0.0
        %774 = vmatprep.subr.mxu0 0.0
        %775 = vmatpush1.msra.mxu0 0.0
        %776 = vmatprep.subr.mxu0 0.0
        %777 = vmatpush1.msra.mxu0 0.0
        %778 = vmatprep.subr.mxu0 0.0
        %779 = vmatpush1.msra.mxu0 0.0
        %780 = vmatprep.subr.mxu0 0.0
        %781 = vmatpush1.msra.mxu0 0.0
        %782 = vmatprep.subr.mxu0 0.0
        %783 = vmatpush1.msra.mxu0 0.0
        %784 = vmatprep.subr.mxu0 0.0
        %785 = vmatpush1.msra.mxu0 0.0
        %786 = vmatprep.subr.mxu0 0.0
        %787 = vmatpush1.msra.mxu0 0.0
        %788 = vmatprep.mubr.f32.mxu0 0.0
        %789 = vmatmul.mubr.f32.gmra.mrb[0].mxu0 %v722
        %v790 = vpop.f32.mrb[0].mxu0
        %v791 = vadd.f32 %v719, %v790
        %v792 = vpop.f32.mrb[0].mxu0
        %v793 = vadd.f32 %v719, %v792
        %794 = vdwg.mxu0
        %v795 = vld [vmem:[#allocation2] sm:$0xff]
        %v796 = vld [vmem:[#allocation2 + $0x8] sm:$0xff]
        %v797 = vld [vmem:[#allocation2 + $0x10] sm:$0xff]
        %v798 = vld [vmem:[#allocation2 + $0x18] sm:$0xff]
        %v799 = vld [vmem:[#allocation2 + $0x20] sm:$0xff]
        %v800 = vld [vmem:[#allocation2 + $0x28] sm:$0xff]
        %v801 = vld [vmem:[#allocation2 + $0x30] sm:$0xff]
        %v802 = vld [vmem:[#allocation2 + $0x38] sm:$0xff]
        %v803 = vld [vmem:[#allocation2 + $0x40] sm:$0xff]
        %v804 = vld [vmem:[#allocation2 + $0x48] sm:$0xff]
        %v805 = vld [vmem:[#allocation2 + $0x50] sm:$0xff]
        %v806 = vld [vmem:[#allocation2 + $0x58] sm:$0xff]
        %v807 = vld [vmem:[#allocation2 + $0x60] sm:$0xff]
        %v808 = vld [vmem:[#allocation2 + $0x68] sm:$0xff]
        %v809 = vld [vmem:[#allocation2 + $0x70] sm:$0xff]
        %v810 = vld [vmem:[#allocation2 + $0x78] sm:$0xff]
        %v811 = vld [vmem:[#allocation2 + $0x80] sm:$0xff]
        %v812 = vld [vmem:[#allocation2 + $0x88] sm:$0xff]
        %v813 = vld [vmem:[#allocation2 + $0x90] sm:$0xff]
        %v814 = vld [vmem:[#allocation2 + $0x98] sm:$0xff]
        %v815 = vld [vmem:[#allocation2 + $0xa0] sm:$0xff]
        %v816 = vld [vmem:[#allocation2 + $0xa8] sm:$0xff]
        %v817 = vld [vmem:[#allocation2 + $0xb0] sm:$0xff]
        %v818 = vld [vmem:[#allocation2 + $0xb8] sm:$0xff]
        %v819 = vld [vmem:[#allocation2 + $0xc0] sm:$0xff]
        %v820 = vld [vmem:[#allocation2 + $0xc8] sm:$0xff]
        %v821 = vld [vmem:[#allocation2 + $0xd0] sm:$0xff]
        %v822 = vld [vmem:[#allocation2 + $0xd8] sm:$0xff]
        %v823 = vld [vmem:[#allocation2 + $0xe0] sm:$0xff]
        %v824 = vld [vmem:[#allocation2 + $0xe8] sm:$0xff]
        %v825 = vld [vmem:[#allocation2 + $0xf0] sm:$0xff]
        %v826 = vld [vmem:[#allocation2 + $0xf8] sm:$0xff]
        %v827 = vld [vmem:[#allocation2 + $0x100] sm:$0xff]
        %v828 = vld [vmem:[#allocation2 + $0x108] sm:$0xff]
        %v829 = vld [vmem:[#allocation2 + $0x110] sm:$0xff]
        %v830 = vld [vmem:[#allocation2 + $0x118] sm:$0xff]
        %v831 = vld [vmem:[#allocation2 + $0x120] sm:$0xff]
        %v832 = vld [vmem:[#allocation2 + $0x128] sm:$0xff]
        %v833 = vld [vmem:[#allocation2 + $0x130] sm:$0xff]
        %v834 = vld [vmem:[#allocation2 + $0x138] sm:$0xff]
        %v835 = vld [vmem:[#allocation2 + $0x140] sm:$0xff]
        %v836 = vld [vmem:[#allocation2 + $0x148] sm:$0xff]
        %v837 = vld [vmem:[#allocation2 + $0x150] sm:$0xff]
        %v838 = vld [vmem:[#allocation2 + $0x158] sm:$0xff]
        %v839 = vld [vmem:[#allocation2 + $0x160] sm:$0xff]
        %v840 = vld [vmem:[#allocation2 + $0x168] sm:$0xff]
        %v841 = vld [vmem:[#allocation2 + $0x170] sm:$0xff]
        %v842 = vld [vmem:[#allocation2 + $0x178] sm:$0xff]
        %v843 = vld [vmem:[#allocation2 + $0x180] sm:$0xff]
        %v844 = vld [vmem:[#allocation2 + $0x188] sm:$0xff]
        %v845 = vld [vmem:[#allocation2 + $0x190] sm:$0xff]
        %v846 = vld [vmem:[#allocation2 + $0x198] sm:$0xff]
        %v847 = vld [vmem:[#allocation2 + $0x1a0] sm:$0xff]
        %v848 = vld [vmem:[#allocation2 + $0x1a8] sm:$0xff]
        %v849 = vld [vmem:[#allocation2 + $0x1b0] sm:$0xff]
        %v850 = vld [vmem:[#allocation2 + $0x1b8] sm:$0xff]
        %v851 = vld [vmem:[#allocation2 + $0x1c0] sm:$0xff]
        %v852 = vld [vmem:[#allocation2 + $0x1c8] sm:$0xff]
        %v853 = vld [vmem:[#allocation2 + $0x1d0] sm:$0xff]
        %v854 = vld [vmem:[#allocation2 + $0x1d8] sm:$0xff]
        %v855 = vld [vmem:[#allocation2 + $0x1e0] sm:$0xff]
        %v856 = vld [vmem:[#allocation2 + $0x1e8] sm:$0xff]
        %v857 = vld [vmem:[#allocation2 + $0x1f0] sm:$0xff]
        %v858 = vld [vmem:[#allocation2 + $0x1f8] sm:$0xff]
        %v859 = vld [vmem:[#allocation2 + $0x200] sm:$0xff]
        %v860 = vld [vmem:[#allocation2 + $0x208] sm:$0xff]
        %v861 = vld [vmem:[#allocation2 + $0x210] sm:$0xff]
        %v862 = vld [vmem:[#allocation2 + $0x218] sm:$0xff]
        %v863 = vld [vmem:[#allocation2 + $0x220] sm:$0xff]
        %v864 = vld [vmem:[#allocation2 + $0x228] sm:$0xff]
        %v865 = vld [vmem:[#allocation2 + $0x230] sm:$0xff]
        %v866 = vld [vmem:[#allocation2 + $0x238] sm:$0xff]
        %v867 = vld [vmem:[#allocation2 + $0x240] sm:$0xff]
        %v868 = vld [vmem:[#allocation2 + $0x248] sm:$0xff]
        %v869 = vld [vmem:[#allocation2 + $0x250] sm:$0xff]
        %v870 = vld [vmem:[#allocation2 + $0x258] sm:$0xff]
        %v871 = vld [vmem:[#allocation2 + $0x260] sm:$0xff]
        %v872 = vld [vmem:[#allocation2 + $0x268] sm:$0xff]
        %v873 = vld [vmem:[#allocation2 + $0x270] sm:$0xff]
        %v874 = vld [vmem:[#allocation2 + $0x278] sm:$0xff]
        %v875 = vld [vmem:[#allocation2 + $0x280] sm:$0xff]
        %v876 = vld [vmem:[#allocation2 + $0x288] sm:$0xff]
        %v877 = vld [vmem:[#allocation2 + $0x290] sm:$0xff]
        %v878 = vld [vmem:[#allocation2 + $0x298] sm:$0xff]
        %v879 = vld [vmem:[#allocation2 + $0x2a0] sm:$0xff]
        %v880 = vld [vmem:[#allocation2 + $0x2a8] sm:$0xff]
        %v881 = vld [vmem:[#allocation2 + $0x2b0] sm:$0xff]
        %v882 = vld [vmem:[#allocation2 + $0x2b8] sm:$0xff]
        %v883 = vld [vmem:[#allocation2 + $0x2c0] sm:$0xff]
        %v884 = vld [vmem:[#allocation2 + $0x2c8] sm:$0xff]
        %v885 = vld [vmem:[#allocation2 + $0x2d0] sm:$0xff]
        %v886 = vld [vmem:[#allocation2 + $0x2d8] sm:$0xff]
        %v887 = vld [vmem:[#allocation2 + $0x2e0] sm:$0xff]
        %v888 = vld [vmem:[#allocation2 + $0x2e8] sm:$0xff]
        %v889 = vld [vmem:[#allocation2 + $0x2f0] sm:$0xff]
        %v890 = vld [vmem:[#allocation2 + $0x2f8] sm:$0xff]
        %v891 = vld [vmem:[#allocation2 + $0x300] sm:$0xff]
        %v892 = vld [vmem:[#allocation2 + $0x308] sm:$0xff]
        %v893 = vld [vmem:[#allocation2 + $0x310] sm:$0xff]
        %v894 = vld [vmem:[#allocation2 + $0x318] sm:$0xff]
        %v895 = vld [vmem:[#allocation2 + $0x320] sm:$0xff]
        %v896 = vld [vmem:[#allocation2 + $0x328] sm:$0xff]
        %v897 = vld [vmem:[#allocation2 + $0x330] sm:$0xff]
        %v898 = vld [vmem:[#allocation2 + $0x338] sm:$0xff]
        %v899 = vld [vmem:[#allocation2 + $0x340] sm:$0xff]
        %v900 = vld [vmem:[#allocation2 + $0x348] sm:$0xff]
        %v901 = vld [vmem:[#allocation2 + $0x350] sm:$0xff]
        %v902 = vld [vmem:[#allocation2 + $0x358] sm:$0xff]
        %v903 = vld [vmem:[#allocation2 + $0x360] sm:$0xff]
        %v904 = vld [vmem:[#allocation2 + $0x368] sm:$0xff]
        %v905 = vld [vmem:[#allocation2 + $0x370] sm:$0xff]
        %v906 = vld [vmem:[#allocation2 + $0x378] sm:$0xff]
        %v907 = vld [vmem:[#allocation2 + $0x380] sm:$0xff]
        %v908 = vld [vmem:[#allocation2 + $0x388] sm:$0xff]
        %v909 = vld [vmem:[#allocation2 + $0x390] sm:$0xff]
        %v910 = vld [vmem:[#allocation2 + $0x398] sm:$0xff]
        %v911 = vld [vmem:[#allocation2 + $0x3a0] sm:$0xff]
        %v912 = vld [vmem:[#allocation2 + $0x3a8] sm:$0xff]
        %v913 = vld [vmem:[#allocation2 + $0x3b0] sm:$0xff]
        %v914 = vld [vmem:[#allocation2 + $0x3b8] sm:$0xff]
        %v915 = vld [vmem:[#allocation2 + $0x3c0] sm:$0xff]
        %v916 = vld [vmem:[#allocation2 + $0x3c8] sm:$0xff]
        %v917 = vld [vmem:[#allocation2 + $0x3d0] sm:$0xff]
        %v918 = vld [vmem:[#allocation2 + $0x3d8] sm:$0xff]
        %v919 = vld [vmem:[#allocation2 + $0x3e0] sm:$0xff]
        %v920 = vld [vmem:[#allocation2 + $0x3e8] sm:$0xff]
        %v921 = vld [vmem:[#allocation2 + $0x3f0] sm:$0xff]
        %v922 = vld [vmem:[#allocation2 + $0x3f8] sm:$0xff]
        %923 = vmatprep.subr.mxu0 %v796
        %924 = vmatpush1.msra.mxu0 %v795
        %925 = vmatprep.subr.mxu0 %v800
        %926 = vmatpush1.msra.mxu0 %v799
        %927 = vmatprep.subr.mxu0 %v804
        %928 = vmatpush1.msra.mxu0 %v803
        %929 = vmatprep.subr.mxu0 %v808
        %930 = vmatpush1.msra.mxu0 %v807
        %931 = vmatprep.subr.mxu0 %v812
        %932 = vmatpush1.msra.mxu0 %v811
        %933 = vmatprep.subr.mxu0 %v816
        %934 = vmatpush1.msra.mxu0 %v815
        %935 = vmatprep.subr.mxu0 %v820
        %936 = vmatpush1.msra.mxu0 %v819
        %937 = vmatprep.subr.mxu0 %v824
        %938 = vmatpush1.msra.mxu0 %v823
        %939 = vmatprep.subr.mxu0 %v828
        %940 = vmatpush1.msra.mxu0 %v827
        %941 = vmatprep.subr.mxu0 %v832
        %942 = vmatpush1.msra.mxu0 %v831
        %943 = vmatprep.subr.mxu0 %v836
        %944 = vmatpush1.msra.mxu0 %v835
        %945 = vmatprep.subr.mxu0 %v840
        %946 = vmatpush1.msra.mxu0 %v839
        %947 = vmatprep.subr.mxu0 %v844
        %948 = vmatpush1.msra.mxu0 %v843
        %949 = vmatprep.subr.mxu0 %v848
        %950 = vmatpush1.msra.mxu0 %v847
        %951 = vmatprep.subr.mxu0 %v852
        %952 = vmatpush1.msra.mxu0 %v851
        %953 = vmatprep.subr.mxu0 %v856
        %954 = vmatpush1.msra.mxu0 %v855
        %955 = vmatprep.subr.mxu0 %v860
        %956 = vmatpush1.msra.mxu0 %v859
        %957 = vmatprep.subr.mxu0 %v864
        %958 = vmatpush1.msra.mxu0 %v863
        %959 = vmatprep.subr.mxu0 %v868
        %960 = vmatpush1.msra.mxu0 %v867
        %961 = vmatprep.subr.mxu0 %v872
        %962 = vmatpush1.msra.mxu0 %v871
        %963 = vmatprep.subr.mxu0 %v876
        %964 = vmatpush1.msra.mxu0 %v875
        %965 = vmatprep.subr.mxu0 %v880
        %966 = vmatpush1.msra.mxu0 %v879
        %967 = vmatprep.subr.mxu0 %v884
        %968 = vmatpush1.msra.mxu0 %v883
        %969 = vmatprep.subr.mxu0 %v888
        %970 = vmatpush1.msra.mxu0 %v887
        %971 = vmatprep.subr.mxu0 %v892
        %972 = vmatpush1.msra.mxu0 %v891
        %973 = vmatprep.subr.mxu0 %v896
        %974 = vmatpush1.msra.mxu0 %v895
        %975 = vmatprep.subr.mxu0 %v900
        %976 = vmatpush1.msra.mxu0 %v899
        %977 = vmatprep.subr.mxu0 %v904
        %978 = vmatpush1.msra.mxu0 %v903
        %979 = vmatprep.subr.mxu0 %v908
        %980 = vmatpush1.msra.mxu0 %v907
        %981 = vmatprep.subr.mxu0 %v912
        %982 = vmatpush1.msra.mxu0 %v911
        %983 = vmatprep.subr.mxu0 %v916
        %984 = vmatpush1.msra.mxu0 %v915
        %985 = vmatprep.subr.mxu0 %v920
        %986 = vmatpush1.msra.mxu0 %v919
        %987 = vmatprep.mubr.f32.mxu0 %v793
        %988 = vmatmul.mubr.f32.gmra.mrb[0].mxu0 %v791
        %v989 = vpop.f32.mrb[0].mxu0
        %v990 = vadd.f32 0.0, %v989
        %v991 = vpop.f32.mrb[0].mxu0
        %v992 = vadd.f32 0.0, %v991
        %993 = vdwg.mxu0
        %994 = vmatprep.subr.mxu0 %v798
        %995 = vmatpush1.msra.mxu0 %v797
        %996 = vmatprep.subr.mxu0 %v802
        %997 = vmatpush1.msra.mxu0 %v801
        %998 = vmatprep.subr.mxu0 %v806
        %999 = vmatpush1.msra.mxu0 %v805
        %1000 = vmatprep.subr.mxu0 %v810
        %1001 = vmatpush1.msra.mxu0 %v809
        %1002 = vmatprep.subr.mxu0 %v814
        %1003 = vmatpush1.msra.mxu0 %v813
        %1004 = vmatprep.subr.mxu0 %v818
        %1005 = vmatpush1.msra.mxu0 %v817
        %1006 = vmatprep.subr.mxu0 %v822
        %1007 = vmatpush1.msra.mxu0 %v821
        %1008 = vmatprep.subr.mxu0 %v826
        %1009 = vmatpush1.msra.mxu0 %v825
        %1010 = vmatprep.subr.mxu0 %v830
        %1011 = vmatpush1.msra.mxu0 %v829
        %1012 = vmatprep.subr.mxu0 %v834
        %1013 = vmatpush1.msra.mxu0 %v833
        %1014 = vmatprep.subr.mxu0 %v838
        %1015 = vmatpush1.msra.mxu0 %v837
        %1016 = vmatprep.subr.mxu0 %v842
        %1017 = vmatpush1.msra.mxu0 %v841
        %1018 = vmatprep.subr.mxu0 %v846
        %1019 = vmatpush1.msra.mxu0 %v845
        %1020 = vmatprep.subr.mxu0 %v850
        %1021 = vmatpush1.msra.mxu0 %v849
        %1022 = vmatprep.subr.mxu0 %v854
        %1023 = vmatpush1.msra.mxu0 %v853
        %1024 = vmatprep.subr.mxu0 %v858
        %1025 = vmatpush1.msra.mxu0 %v857
        %1026 = vmatprep.subr.mxu0 %v862
        %1027 = vmatpush1.msra.mxu0 %v861
        %1028 = vmatprep.subr.mxu0 %v866
        %1029 = vmatpush1.msra.mxu0 %v865
        %1030 = vmatprep.subr.mxu0 %v870
        %1031 = vmatpush1.msra.mxu0 %v869
        %1032 = vmatprep.subr.mxu0 %v874
        %1033 = vmatpush1.msra.mxu0 %v873
        %1034 = vmatprep.subr.mxu0 %v878
        %1035 = vmatpush1.msra.mxu0 %v877
        %1036 = vmatprep.subr.mxu0 %v882
        %1037 = vmatpush1.msra.mxu0 %v881
        %1038 = vmatprep.subr.mxu0 %v886
        %1039 = vmatpush1.msra.mxu0 %v885
        %1040 = vmatprep.subr.mxu0 %v890
        %1041 = vmatpush1.msra.mxu0 %v889
        %1042 = vmatprep.subr.mxu0 %v894
        %1043 = vmatpush1.msra.mxu0 %v893
        %1044 = vmatprep.subr.mxu0 %v898
        %1045 = vmatpush1.msra.mxu0 %v897
        %1046 = vmatprep.subr.mxu0 %v902
        %1047 = vmatpush1.msra.mxu0 %v901
        %1048 = vmatprep.subr.mxu0 %v906
        %1049 = vmatpush1.msra.mxu0 %v905
        %1050 = vmatprep.subr.mxu0 %v910
        %1051 = vmatpush1.msra.mxu0 %v909
        %1052 = vmatprep.subr.mxu0 %v914
        %1053 = vmatpush1.msra.mxu0 %v913
        %1054 = vmatprep.subr.mxu0 %v918
        %1055 = vmatpush1.msra.mxu0 %v917
        %1056 = vmatprep.subr.mxu0 %v922
        %1057 = vmatpush1.msra.mxu0 %v921
        %1058 = vmatprep.mubr.f32.mxu0 %v793
        %1059 = vmatmul.mubr.f32.gmra.mrb[0].mxu0 %v791
        %v1060 = vpop.f32.mrb[0].mxu0
        %v1061 = vadd.f32 0.0, %v1060
        %v1062 = vpop.f32.mrb[0].mxu0
        %v1063 = vadd.f32 0.0, %v1062
        %1064 = vdwg.mxu0
        %v1065 = vmul.f32 %v710, %v990
        %v1066 = vmul.f32 %v712, %v992
        %v1067 = vmul.f32 %v710, %v1061
        %v1068 = vmul.f32 %v712, %v1063
        %1069 = vmatprep.subr.mxu0 %v796
        %1070 = vmatpush1.msra.mxu0 %v795
        %1071 = vmatprep.subr.mxu0 %v800
        %1072 = vmatpush1.msra.mxu0 %v799
        %1073 = vmatprep.subr.mxu0 %v804
        %1074 = vmatpush1.msra.mxu0 %v803
        %1075 = vmatprep.subr.mxu0 %v808
        %1076 = vmatpush1.msra.mxu0 %v807
        %1077 = vmatprep.subr.mxu0 %v812
        %1078 = vmatpush1.msra.mxu0 %v811
        %1079 = vmatprep.subr.mxu0 %v816
        %1080 = vmatpush1.msra.mxu0 %v815
        %1081 = vmatprep.subr.mxu0 %v820
        %1082 = vmatpush1.msra.mxu0 %v819
        %1083 = vmatprep.subr.mxu0 %v824
        %1084 = vmatpush1.msra.mxu0 %v823
        %1085 = vmatprep.subr.mxu0 %v828
        %1086 = vmatpush1.msra.mxu0 %v827
        %1087 = vmatprep.subr.mxu0 %v832
        %1088 = vmatpush1.msra.mxu0 %v831
        %1089 = vmatprep.subr.mxu0 %v836
        %1090 = vmatpush1.msra.mxu0 %v835
        %1091 = vmatprep.subr.mxu0 %v840
        %1092 = vmatpush1.msra.mxu0 %v839
        %1093 = vmatprep.subr.mxu0 %v844
        %1094 = vmatpush1.msra.mxu0 %v843
        %1095 = vmatprep.subr.mxu0 %v848
        %1096 = vmatpush1.msra.mxu0 %v847
        %1097 = vmatprep.subr.mxu0 %v852
        %1098 = vmatpush1.msra.mxu0 %v851
        %1099 = vmatprep.subr.mxu0 %v856
        %1100 = vmatpush1.msra.mxu0 %v855
        %1101 = vmatprep.subr.mxu0 %v860
        %1102 = vmatpush1.msra.mxu0 %v859
        %1103 = vmatprep.subr.mxu0 %v864
        %1104 = vmatpush1.msra.mxu0 %v863
        %1105 = vmatprep.subr.mxu0 %v868
        %1106 = vmatpush1.msra.mxu0 %v867
        %1107 = vmatprep.subr.mxu0 %v872
        %1108 = vmatpush1.msra.mxu0 %v871
        %1109 = vmatprep.subr.mxu0 %v876
        %1110 = vmatpush1.msra.mxu0 %v875
        %1111 = vmatprep.subr.mxu0 %v880
        %1112 = vmatpush1.msra.mxu0 %v879
        %1113 = vmatprep.subr.mxu0 %v884
        %1114 = vmatpush1.msra.mxu0 %v883
        %1115 = vmatprep.subr.mxu0 %v888
        %1116 = vmatpush1.msra.mxu0 %v887
        %1117 = vmatprep.subr.mxu0 %v892
        %1118 = vmatpush1.msra.mxu0 %v891
        %1119 = vmatprep.subr.mxu0 %v896
        %1120 = vmatpush1.msra.mxu0 %v895
        %1121 = vmatprep.subr.mxu0 %v900
        %1122 = vmatpush1.msra.mxu0 %v899
        %1123 = vmatprep.subr.mxu0 %v904
        %1124 = vmatpush1.msra.mxu0 %v903
        %1125 = vmatprep.subr.mxu0 %v908
        %1126 = vmatpush1.msra.mxu0 %v907
        %1127 = vmatprep.subr.mxu0 %v912
        %1128 = vmatpush1.msra.mxu0 %v911
        %1129 = vmatprep.subr.mxu0 %v916
        %1130 = vmatpush1.msra.mxu0 %v915
        %1131 = vmatprep.subr.mxu0 %v920
        %1132 = vmatpush1.msra.mxu0 %v919
        %1133 = vmatprep.mubr.f32.mxu0 %v1066
        %1134 = vmatmul.mubr.f32.gmra.mrb[0].mxu0 %v1065
        %v1135 = vpop.f32.mrb[0].mxu0
        %v1136 = vadd.f32 0.0, %v1135
        %v1137 = vpop.f32.mrb[0].mxu0
        %v1138 = vadd.f32 0.0, %v1137
        %1139 = vdwg.mxu0
        %1140 = vmatprep.subr.mxu0 %v798
        %1141 = vmatpush1.msra.mxu0 %v797
        %1142 = vmatprep.subr.mxu0 %v802
        %1143 = vmatpush1.msra.mxu0 %v801
        %1144 = vmatprep.subr.mxu0 %v806
        %1145 = vmatpush1.msra.mxu0 %v805
        %1146 = vmatprep.subr.mxu0 %v810
        %1147 = vmatpush1.msra.mxu0 %v809
        %1148 = vmatprep.subr.mxu0 %v814
        %1149 = vmatpush1.msra.mxu0 %v813
        %1150 = vmatprep.subr.mxu0 %v818
        %1151 = vmatpush1.msra.mxu0 %v817
        %1152 = vmatprep.subr.mxu0 %v822
        %1153 = vmatpush1.msra.mxu0 %v821
        %1154 = vmatprep.subr.mxu0 %v826
        %1155 = vmatpush1.msra.mxu0 %v825
        %1156 = vmatprep.subr.mxu0 %v830
        %1157 = vmatpush1.msra.mxu0 %v829
        %1158 = vmatprep.subr.mxu0 %v834
        %1159 = vmatpush1.msra.mxu0 %v833
        %1160 = vmatprep.subr.mxu0 %v838
        %1161 = vmatpush1.msra.mxu0 %v837
        %1162 = vmatprep.subr.mxu0 %v842
        %1163 = vmatpush1.msra.mxu0 %v841
        %1164 = vmatprep.subr.mxu0 %v846
        %1165 = vmatpush1.msra.mxu0 %v845
        %1166 = vmatprep.subr.mxu0 %v850
        %1167 = vmatpush1.msra.mxu0 %v849
        %1168 = vmatprep.subr.mxu0 %v854
        %1169 = vmatpush1.msra.mxu0 %v853
        %1170 = vmatprep.subr.mxu0 %v858
        %1171 = vmatpush1.msra.mxu0 %v857
        %1172 = vmatprep.subr.mxu0 %v862
        %1173 = vmatpush1.msra.mxu0 %v861
        %1174 = vmatprep.subr.mxu0 %v866
        %1175 = vmatpush1.msra.mxu0 %v865
        %1176 = vmatprep.subr.mxu0 %v870
        %1177 = vmatpush1.msra.mxu0 %v869
        %1178 = vmatprep.subr.mxu0 %v874
        %1179 = vmatpush1.msra.mxu0 %v873
        %1180 = vmatprep.subr.mxu0 %v878
        %1181 = vmatpush1.msra.mxu0 %v877
        %1182 = vmatprep.subr.mxu0 %v882
        %1183 = vmatpush1.msra.mxu0 %v881
        %1184 = vmatprep.subr.mxu0 %v886
        %1185 = vmatpush1.msra.mxu0 %v885
        %1186 = vmatprep.subr.mxu0 %v890
        %1187 = vmatpush1.msra.mxu0 %v889
        %1188 = vmatprep.subr.mxu0 %v894
        %1189 = vmatpush1.msra.mxu0 %v893
        %1190 = vmatprep.subr.mxu0 %v898
        %1191 = vmatpush1.msra.mxu0 %v897
        %1192 = vmatprep.subr.mxu0 %v902
        %1193 = vmatpush1.msra.mxu0 %v901
        %1194 = vmatprep.subr.mxu0 %v906
        %1195 = vmatpush1.msra.mxu0 %v905
        %1196 = vmatprep.subr.mxu0 %v910
        %1197 = vmatpush1.msra.mxu0 %v909
        %1198 = vmatprep.subr.mxu0 %v914
        %1199 = vmatpush1.msra.mxu0 %v913
        %1200 = vmatprep.subr.mxu0 %v918
        %1201 = vmatpush1.msra.mxu0 %v917
        %1202 = vmatprep.subr.mxu0 %v922
        %1203 = vmatpush1.msra.mxu0 %v921
        %1204 = vmatprep.mubr.f32.mxu0 %v1066
        %1205 = vmatmul.mubr.f32.gmra.mrb[0].mxu0 %v1065
        %v1206 = vpop.f32.mrb[0].mxu0
        %v1207 = vadd.f32 0.0, %v1206
        %v1208 = vpop.f32.mrb[0].mxu0
        %v1209 = vadd.f32 0.0, %v1208
        %1210 = vdwg.mxu0
        %1211 = vmatprep.subr.mxu0 %v796
        %1212 = vmatpush1.msra.mxu0 %v795
        %1213 = vmatprep.subr.mxu0 %v800
        %1214 = vmatpush1.msra.mxu0 %v799
        %1215 = vmatprep.subr.mxu0 %v804
        %1216 = vmatpush1.msra.mxu0 %v803
        %1217 = vmatprep.subr.mxu0 %v808
        %1218 = vmatpush1.msra.mxu0 %v807
        %1219 = vmatprep.subr.mxu0 %v812
        %1220 = vmatpush1.msra.mxu0 %v811
        %1221 = vmatprep.subr.mxu0 %v816
        %1222 = vmatpush1.msra.mxu0 %v815
        %1223 = vmatprep.subr.mxu0 %v820
        %1224 = vmatpush1.msra.mxu0 %v819
        %1225 = vmatprep.subr.mxu0 %v824
        %1226 = vmatpush1.msra.mxu0 %v823
        %1227 = vmatprep.subr.mxu0 %v828
        %1228 = vmatpush1.msra.mxu0 %v827
        %1229 = vmatprep.subr.mxu0 %v832
        %1230 = vmatpush1.msra.mxu0 %v831
        %1231 = vmatprep.subr.mxu0 %v836
        %1232 = vmatpush1.msra.mxu0 %v835
        %1233 = vmatprep.subr.mxu0 %v840
        %1234 = vmatpush1.msra.mxu0 %v839
        %1235 = vmatprep.subr.mxu0 %v844
        %1236 = vmatpush1.msra.mxu0 %v843
        %1237 = vmatprep.subr.mxu0 %v848
        %1238 = vmatpush1.msra.mxu0 %v847
        %1239 = vmatprep.subr.mxu0 %v852
        %1240 = vmatpush1.msra.mxu0 %v851
        %1241 = vmatprep.subr.mxu0 %v856
        %1242 = vmatpush1.msra.mxu0 %v855
        %1243 = vmatprep.subr.mxu0 %v860
        %1244 = vmatpush1.msra.mxu0 %v859
        %1245 = vmatprep.subr.mxu0 %v864
        %1246 = vmatpush1.msra.mxu0 %v863
        %1247 = vmatprep.subr.mxu0 %v868
        %1248 = vmatpush1.msra.mxu0 %v867
        %1249 = vmatprep.subr.mxu0 %v872
        %1250 = vmatpush1.msra.mxu0 %v871
        %1251 = vmatprep.subr.mxu0 %v876
        %1252 = vmatpush1.msra.mxu0 %v875
        %1253 = vmatprep.subr.mxu0 %v880
        %1254 = vmatpush1.msra.mxu0 %v879
        %1255 = vmatprep.subr.mxu0 %v884
        %1256 = vmatpush1.msra.mxu0 %v883
        %1257 = vmatprep.subr.mxu0 %v888
        %1258 = vmatpush1.msra.mxu0 %v887
        %1259 = vmatprep.subr.mxu0 %v892
        %1260 = vmatpush1.msra.mxu0 %v891
        %1261 = vmatprep.subr.mxu0 %v896
        %1262 = vmatpush1.msra.mxu0 %v895
        %1263 = vmatprep.subr.mxu0 %v900
        %1264 = vmatpush1.msra.mxu0 %v899
        %1265 = vmatprep.subr.mxu0 %v904
        %1266 = vmatpush1.msra.mxu0 %v903
        %1267 = vmatprep.subr.mxu0 %v908
        %1268 = vmatpush1.msra.mxu0 %v907
        %1269 = vmatprep.subr.mxu0 %v912
        %1270 = vmatpush1.msra.mxu0 %v911
        %1271 = vmatprep.subr.mxu0 %v916
        %1272 = vmatpush1.msra.mxu0 %v915
        %1273 = vmatprep.subr.mxu0 %v920
        %1274 = vmatpush1.msra.mxu0 %v919
        %1275 = vmatprep.mubr.f32.mxu0 %v1068
        %1276 = vmatmul.mubr.f32.gmra.mrb[0].mxu0 %v1067
        %v1277 = vpop.f32.mrb[0].mxu0
        %v1278 = vadd.f32 0.0, %v1277
        %v1279 = vpop.f32.mrb[0].mxu0
        %v1280 = vadd.f32 0.0, %v1279
        %1281 = vdwg.mxu0
        %1282 = vmatprep.subr.mxu0 %v798
        %1283 = vmatpush1.msra.mxu0 %v797
        %1284 = vmatprep.subr.mxu0 %v802
        %1285 = vmatpush1.msra.mxu0 %v801
        %1286 = vmatprep.subr.mxu0 %v806
        %1287 = vmatpush1.msra.mxu0 %v805
        %1288 = vmatprep.subr.mxu0 %v810
        %1289 = vmatpush1.msra.mxu0 %v809
        %1290 = vmatprep.subr.mxu0 %v814
        %1291 = vmatpush1.msra.mxu0 %v813
        %1292 = vmatprep.subr.mxu0 %v818
        %1293 = vmatpush1.msra.mxu0 %v817
        %1294 = vmatprep.subr.mxu0 %v822
        %1295 = vmatpush1.msra.mxu0 %v821
        %1296 = vmatprep.subr.mxu0 %v826
        %1297 = vmatpush1.msra.mxu0 %v825
        %1298 = vmatprep.subr.mxu0 %v830
        %1299 = vmatpush1.msra.mxu0 %v829
        %1300 = vmatprep.subr.mxu0 %v834
        %1301 = vmatpush1.msra.mxu0 %v833
        %1302 = vmatprep.subr.mxu0 %v838
        %1303 = vmatpush1.msra.mxu0 %v837
        %1304 = vmatprep.subr.mxu0 %v842
        %1305 = vmatpush1.msra.mxu0 %v841
        %1306 = vmatprep.subr.mxu0 %v846
        %1307 = vmatpush1.msra.mxu0 %v845
        %1308 = vmatprep.subr.mxu0 %v850
        %1309 = vmatpush1.msra.mxu0 %v849
        %1310 = vmatprep.subr.mxu0 %v854
        %1311 = vmatpush1.msra.mxu0 %v853
        %1312 = vmatprep.subr.mxu0 %v858
        %1313 = vmatpush1.msra.mxu0 %v857
        %1314 = vmatprep.subr.mxu0 %v862
        %1315 = vmatpush1.msra.mxu0 %v861
        %1316 = vmatprep.subr.mxu0 %v866
        %1317 = vmatpush1.msra.mxu0 %v865
        %1318 = vmatprep.subr.mxu0 %v870
        %1319 = vmatpush1.msra.mxu0 %v869
        %1320 = vmatprep.subr.mxu0 %v874
        %1321 = vmatpush1.msra.mxu0 %v873
        %1322 = vmatprep.subr.mxu0 %v878
        %1323 = vmatpush1.msra.mxu0 %v877
        %1324 = vmatprep.subr.mxu0 %v882
        %1325 = vmatpush1.msra.mxu0 %v881
        %1326 = vmatprep.subr.mxu0 %v886
        %1327 = vmatpush1.msra.mxu0 %v885
        %1328 = vmatprep.subr.mxu0 %v890
        %1329 = vmatpush1.msra.mxu0 %v889
        %1330 = vmatprep.subr.mxu0 %v894
        %1331 = vmatpush1.msra.mxu0 %v893
        %1332 = vmatprep.subr.mxu0 %v898
        %1333 = vmatpush1.msra.mxu0 %v897
        %1334 = vmatprep.subr.mxu0 %v902
        %1335 = vmatpush1.msra.mxu0 %v901
        %1336 = vmatprep.subr.mxu0 %v906
        %1337 = vmatpush1.msra.mxu0 %v905
        %1338 = vmatprep.subr.mxu0 %v910
        %1339 = vmatpush1.msra.mxu0 %v909
        %1340 = vmatprep.subr.mxu0 %v914
        %1341 = vmatpush1.msra.mxu0 %v913
        %1342 = vmatprep.subr.mxu0 %v918
        %1343 = vmatpush1.msra.mxu0 %v917
        %1344 = vmatprep.subr.mxu0 %v922
        %1345 = vmatpush1.msra.mxu0 %v921
        %1346 = vmatprep.mubr.f32.mxu0 %v1068
        %1347 = vmatmul.mubr.f32.gmra.mrb[0].mxu0 %v1067
        %v1348 = vpop.f32.mrb[0].mxu0
        %v1349 = vadd.f32 0.0, %v1348
        %v1350 = vpop.f32.mrb[0].mxu0
        %v1351 = vadd.f32 0.0, %v1350
        %1352 = vdwg.mxu0
        %v1353 = vadd.f32 %v1136, %v1349
        %v1354 = vadd.f32 %v1138, %v1351
        %v1355 = vmul.f32 %v1353, 0.00390625
        %v1356 = vmul.f32 %v1354, 0.00390625
        %v1357 = vsub.f32 %v1278, %v1207
        %v1358 = vsub.f32 %v1280, %v1209
        %v1359 = vmul.f32 %v1357, 0.00390625
        %v1360 = vmul.f32 %v1358, 0.00390625
        %v1361 = vmul.f32 %v1355, %v1355
        %v1362 = vmul.f32 %v1356, %v1356
        %v1363 = vmul.f32 %v1359, %v1359
        %v1364 = vmul.f32 %v1360, %v1360
        %v1365 = vadd.f32 %v1361, %v1363
        %v1366 = vadd.f32 %v1362, %v1364
        %v1367 = vrsqrt.pop %v1365
        %v1368 = vmul.f32 %v1365, %v1367
        %vm1369 = vcmp.eq.f32.partialorder %v1365, inf
        %v1370 = vsel %vm1369, %v1365, %v1368
        %vm1371 = vcmp.eq.f32.partialorder %v1365, 0.0
        %v1372 = vand.u32 %v1365, 2147483648
        %v1373 = vsel %vm1371, %v1372, %v1370
        %v1374 = vrsqrt.pop %v1366
        %v1375 = vmul.f32 %v1366, %v1374
        %vm1376 = vcmp.eq.f32.partialorder %v1366, inf
        %v1377 = vsel %vm1376, %v1366, %v1375
        %vm1378 = vcmp.eq.f32.partialorder %v1366, 0.0
        %v1379 = vand.u32 %v1366, 2147483648
        %v1380 = vsel %vm1378, %v1379, %v1377
        %v1381 = vld [vmem:[%s10] sm:$0xf]
        %1383 = vset.pattern.permute.xlu0 0
        %1384 = vperm.xlu0 %1383, %v1381
        %v1385 = vpop.permute.xlu0 %1384
        %v1387 = vmul.f32 %v1373, %v1385
        %v1388 = vmul.f32 %v1380, %v1385
        %v1389 = vld [vmem:[%s11] sm:$0xf]
        %1391 = vset.pattern.permute.xlu0 0
        %1392 = vperm.xlu0 %1391, %v1389
        %v1393 = vpop.permute.xlu0 %1392
        %v1395 = vmul.f32 %v625, %v1393
        %v1396 = vmul.f32 %v626, %v1393
        %v1397 = vadd.f32 %v1387, %v1395
        %v1398 = vadd.f32 %v1388, %v1396
        %v1399 = vld [vmem:[%s8] sm:$0xf]
        %1401 = vset.pattern.permute.xlu0 0
        %1402 = vperm.xlu0 %1401, %v1399
        %v1403 = vpop.permute.xlu0 %1402
        %v1405 = vmul.f32 %v623, %v1403
        %v1406 = vmul.f32 %v624, %v1403
        %v1407 = vld [vmem:[%s9] sm:$0xf]
        %1409 = vset.pattern.permute.xlu0 0
        %1410 = vperm.xlu0 %1409, %v1407
        %v1411 = vpop.permute.xlu0 %1410
        %v1413 = vadd.f32 %v1405, %v1411
        %v1414 = vadd.f32 %v1406, %v1411
        %v1417 = vcombine.low %v1413, %v1414
        %v1419 = vadd.f32 %v481, %v1417
        %v1422 = vcombine.low %v1397, %v1398
        %v1424 = vadd.f32 %v1419, %v1422
        %v1425 = vmax.f32 %v1424, 0.0
        %v1426 = vld [vmem:[%s12] sm:$0xf]
        %v1427 = vld [vmem:[%s13] sm:$0xf]
        %1429 = vset.pattern.permute.xlu0 0
        %1430 = vperm.xlu0 %1429, %v1427
        %v1431 = vpop.permute.xlu0 %1430
        %v1434 = vcombine.high %v1425, %v1425
        %v1436 = vsel %vm491, %v1426, 0
        %v1438 = vsel %vm495, %v1425, 0
        %v1440 = vsel %vm495, %v1434, 0
        %1442 = vmatprep.subr.mxu0 %v1440
        %1443 = vmatpush1.msra.mxu0 %v1438
        %1444 = vmatprep.subr.mxu0 0.0
        %1445 = vmatpush1.msra.mxu0 0.0
        %1446 = vmatprep.subr.mxu0 0.0
        %1447 = vmatpush1.msra.mxu0 0.0
        %1448 = vmatprep.subr.mxu0 0.0
        %1449 = vmatpush1.msra.mxu0 0.0
        %1450 = vmatprep.subr.mxu0 0.0
        %1451 = vmatpush1.msra.mxu0 0.0
        %1452 = vmatprep.subr.mxu0 0.0
        %1453 = vmatpush1.msra.mxu0 0.0
        %1454 = vmatprep.subr.mxu0 0.0
        %1455 = vmatpush1.msra.mxu0 0.0
        %1456 = vmatprep.subr.mxu0 0.0
        %1457 = vmatpush1.msra.mxu0 0.0
        %1458 = vmatprep.subr.mxu0 0.0
        %1459 = vmatpush1.msra.mxu0 0.0
        %1460 = vmatprep.subr.mxu0 0.0
        %1461 = vmatpush1.msra.mxu0 0.0
        %1462 = vmatprep.subr.mxu0 0.0
        %1463 = vmatpush1.msra.mxu0 0.0
        %1464 = vmatprep.subr.mxu0 0.0
        %1465 = vmatpush1.msra.mxu0 0.0
        %1466 = vmatprep.subr.mxu0 0.0
        %1467 = vmatpush1.msra.mxu0 0.0
        %1468 = vmatprep.subr.mxu0 0.0
        %1469 = vmatpush1.msra.mxu0 0.0
        %1470 = vmatprep.subr.mxu0 0.0
        %1471 = vmatpush1.msra.mxu0 0.0
        %1472 = vmatprep.subr.mxu0 0.0
        %1473 = vmatpush1.msra.mxu0 0.0
        %1474 = vmatprep.subr.mxu0 0.0
        %1475 = vmatpush1.msra.mxu0 0.0
        %1476 = vmatprep.subr.mxu0 0.0
        %1477 = vmatpush1.msra.mxu0 0.0
        %1478 = vmatprep.subr.mxu0 0.0
        %1479 = vmatpush1.msra.mxu0 0.0
        %1480 = vmatprep.subr.mxu0 0.0
        %1481 = vmatpush1.msra.mxu0 0.0
        %1482 = vmatprep.subr.mxu0 0.0
        %1483 = vmatpush1.msra.mxu0 0.0
        %1484 = vmatprep.subr.mxu0 0.0
        %1485 = vmatpush1.msra.mxu0 0.0
        %1486 = vmatprep.subr.mxu0 0.0
        %1487 = vmatpush1.msra.mxu0 0.0
        %1488 = vmatprep.subr.mxu0 0.0
        %1489 = vmatpush1.msra.mxu0 0.0
        %1490 = vmatprep.subr.mxu0 0.0
        %1491 = vmatpush1.msra.mxu0 0.0
        %1492 = vmatprep.subr.mxu0 0.0
        %1493 = vmatpush1.msra.mxu0 0.0
        %1494 = vmatprep.subr.mxu0 0.0
        %1495 = vmatpush1.msra.mxu0 0.0
        %1496 = vmatprep.subr.mxu0 0.0
        %1497 = vmatpush1.msra.mxu0 0.0
        %1498 = vmatprep.subr.mxu0 0.0
        %1499 = vmatpush1.msra.mxu0 0.0
        %1500 = vmatprep.subr.mxu0 0.0
        %1501 = vmatpush1.msra.mxu0 0.0
        %1502 = vmatprep.subr.mxu0 0.0
        %1503 = vmatpush1.msra.mxu0 0.0
        %1504 = vmatprep.subr.mxu0 0.0
        %1505 = vmatpush1.msra.mxu0 0.0
        %1506 = vmatprep.mubr.f32.mxu0 0.0
        %1507 = vmatmul.mubr.f32.gmra.mrb[0].mxu0 %v1436
        %v1508 = vpop.f32.mrb[0].mxu0
        %v1509 = vadd.f32 %v1431, %v1508
        %v1510 = vpop.f32.mrb[0].mxu0
        %v1511 = vadd.f32 %v1431, %v1510
        %1512 = vdwg.mxu0
        %v1515 = vcombine.low %v1509, %v1511
        %1517 = vst [vmem:[%s475] sm:$0xff] %v1515
        %s1518 = sand.u32 %s336, 1
        %s1519 = scalar_lea.sflag [#allocation4], %s1518
        %s1520 = sand.u32 %s336, 1
        %s1521 = smul.addr %s1520, 8
        %s1522 = scalar_lea.vmem [#allocation5], %s1521
        // Predicated region
        $region81: #{tpu_custom_call.1} parent=75 // pred_check
          %p1523 = pneg %p346
        $region82: #{tpu_custom_call.1} parent=75 // pred_check_branch
          %1525 = sbr.rel (%p1523) target = $region84
        $region83: #{tpu_custom_call.1} parent=75 // pred_region
          %s1527 = ssub.s32 128, 128
          %1528 = vsyncadd %s1519, %s1527
          %s1529 = smul.addr %s29, 2
          %s1530 = smul.addr %s1529, 64
          %s1531 = scalar_lea.hbm %s14, %s1530
          %s1533 = sshll.u32 %s1522, 4
          %s1534 = int_to_ptr.vmem [resolvable:$true] %s1533
          %1536 = dma.vmem_to_hbm [thread:$0]  %s1534, 128, %s1531, %s1519
        $region84: #{tpu_custom_call.1} parent=75 // pred_fallthru
          _
      $region76: #{tpu_custom_call.1} parent=5 // pred_fallthru
        _
      %p1537 = scmp.le.s32.totalorder 2, %s24
      // Predicated region
      $region85: #{tpu_custom_call.1} parent=5 // pred_check
        %p1538 = pneg %p1537
      $region86: #{tpu_custom_call.1} parent=5 // pred_check_branch
        %1540 = sbr.rel (%p1538) target = $region88
      $region87: #{tpu_custom_call.1} parent=5 // pred_region
        %s1541 = ssub.s32 %s24, 2
        // Predicated region
        $region89: #{tpu_custom_call.1} parent=87 // pred_check
          %p1542 = pneg %p352
        $region90: #{tpu_custom_call.1} parent=87 // pred_check_branch
          %1544 = sbr.rel (%p1542) target = $region92
        $region91: #{tpu_custom_call.1} parent=87 // pred_region
          %s1545 = sand.u32 %s337, 1
          %s1546 = scalar_lea.sflag [#allocation4], %s1545
          %s1547 = sand.u32 %s337, 1
          %s1548 = smul.addr %s1547, 8
          %s1549 = scalar_lea.vmem [#allocation5], %s1548
          %1550 = dma.done %s1546, 128
        $region92: #{tpu_custom_call.1} parent=87 // pred_fallthru
          _
      $region88: #{tpu_custom_call.1} parent=5 // pred_fallthru
        _
    $region6: #{tpu_custom_call.1} parent=1 // loop_footer
      %s28 = sadd.s32 1, %s24
    $region7: #{tpu_custom_call.1} parent=1 // loop_footer_branch
      %23 = sbr.rel target = $region3
    $region8: #{tpu_custom_call.1} parent=1 // loop_exit
      _
    %1551 = vsyncpa [#allocation3], 1
    %s1552 = scalar_lea.sflag [#allocation3], 1
    %1553 = vsyncpa %s1552, 1
    %1554 = vsyncpa [#allocation4], 1
    %s1555 = scalar_lea.sflag [#allocation4], 1
    %1556 = vsyncpa %s1555, 1

</llo_original>
